<compile_context>
chip_gen: v7x
topology: tpu7x:2x2x1
jax: 0.10.0
libtpu: 0.0.40
codegen_flags: <defaults>
</compile_context>

<pallas_src>
import jax
import jax.numpy as jnp
from jax.experimental import pallas as pl
from jax.experimental.pallas import tpu as pltpu


def _dual_encoder_kernel(xr_ref, xd_ref,
                         w1_ref, b1_ref, w2_ref, b2_ref,
                         w3_ref, b3_ref, w4_ref, b4_ref,
                         out_ref):
    """Block-diagonal fused dual-stream encoder for one pixel tile.

    xr/xd refs: (C, TP)   f32 activations, pixels on the lane axis
    w* refs:    block-diagonal (out_rgb+out_dep, in_rgb+in_dep), compute dtype
    b* refs:    (out, 1)  f32 columns, block-ordered [rgb | depth]; b3 is the
                per-sample effective bias (goal embedding already folded in)
    out ref:    (2*Cout, TP)  rgb channels [0,Cout), depth [Cout, 2*Cout)
    """
    cd = w1_ref.dtype  # MXU operand dtype (bf16 by default, f32 optional)
    # In-kernel cast: the f32 -> bf16 conversion rides the VPU under the
    # matmuls instead of costing an extra HBM pass in the wrapper.
    x = jnp.concatenate([xr_ref[...].astype(cd), xd_ref[...].astype(cd)],
                        axis=0)                                   # (2C, TP)
    # NOTE: default MXU precision; pass f32 operands for tighter parity
    # (accumulation is always f32 via preferred_element_type).
    h = jnp.dot(w1_ref[...], x, preferred_element_type=jnp.float32)
    h = jnp.maximum(h + b1_ref[...], 0.0).astype(cd)              # (256, TP)
    h = jnp.dot(w2_ref[...], h, preferred_element_type=jnp.float32)
    h = jnp.maximum(h + b2_ref[...], 0.0).astype(cd)              # (64, TP)
    h = jnp.dot(w3_ref[...], h, preferred_element_type=jnp.float32)
    h = jnp.maximum(h + b3_ref[...], 0.0).astype(cd)              # (256, TP)
    y = jnp.dot(w4_ref[...], h, preferred_element_type=jnp.float32)
    out_ref[...] = (y + b4_ref[...]).astype(out_ref.dtype)        # (64, TP)


def _block_diag(a, b):
    """blockdiag(a, b) for 2-D (out, in) weights."""
    oa, ia = a.shape
    ob, ib = b.shape
    z = jnp.zeros((oa + ob, ia + ib), a.dtype)
    z = z.at[:oa, :ia].set(a)
    z = z.at[oa:, ia:].set(b)
    return z


def _pick_pixel_tile(P, pixel_tile, batch, cin, cout2,
                     min_grid_steps=8, vmem_budget=24 * 1024 * 1024):
    """Choose a lane-dense pixel tile.

    Returns (TP, P_pad): TP is a multiple of 128 that divides P_pad,
    (a) capped so double-buffered input/output tiles fit `vmem_budget`
        (matters for real resnet channel counts, esp. v7x's 64 MiB VMEM),
    (b) preferring the largest tile that still leaves >= min_grid_steps grid
        steps so both v7x TensorCores get work (no-op on v5e/v6e).
    P_pad rounds P up to a multiple of 128 (wrapper pads & slices) so stores
    are never masked.
    """
    P_pad = -(-P // 128) * 128
    # two f32 input tiles + f32 output tile, double-buffered, plus a rough
    # allowance for the (256, TP) f32 intermediates.
    bytes_per_lane = 2 * (2 * cin * 4) + 2 * (cout2 * 4) + 4 * 256 * 4
    cap = max(128, (vmem_budget // bytes_per_lane) // 128 * 128)
    hi = max(128, (min(pixel_tile, cap, P_pad) // 128) * 128)
    divisors = [t for t in range(128, P_pad + 1, 128) if P_pad % t == 0]
    cands = [t for t in divisors if t <= hi] or [128]
    good = [t for t in cands if batch * (P_pad // t) >= min_grid_steps]
    tp = max(good) if good else min(cands)
    return tp, P_pad


def init_params(key, cin, goal_dims=32,
                resnet_hid=(128, 32), comb_hid=(128, 32)):
    """Deterministic synthetic parameters.

    Conv weights stored (out, in) (PyTorch Conv2d 1x1 weight squeezed),
    Linear weight stored (out, in) = (goal_dims, 2), biases 1-D (out,).
    The combiner first conv is split into w3a (compressed-feature part, first
    32 input channels of torch.cat) and w3b (goal part, last goal_dims).
    """
    keys = iter(jax.random.split(key, 32))
    scale = 0.05

    def w(shape):
        return (scale * jax.random.normal(next(keys), shape)).astype(jnp.float32)

    params = {"wg": w((goal_dims, 2)), "bg": w((goal_dims,))}
    for s in ("rgb", "depth"):
        params[f"{s}_w1"] = w((resnet_hid[0], cin))
        params[f"{s}_b1"] = w((resnet_hid[0],))
        params[f"{s}_w2"] = w((resnet_hid[1], resnet_hid[0]))
        params[f"{s}_b2"] = w((resnet_hid[1],))
        params[f"{s}_w3a"] = w((comb_hid[0], resnet_hid[1]))
        params[f"{s}_w3b"] = w((comb_hid[0], goal_dims))
        params[f"{s}_b3"] = w((comb_hid[0],))
        params[f"{s}_w4"] = w((comb_hid[1], comb_hid[0]))
        params[f"{s}_b4"] = w((comb_hid[1],))
    return params


def resnet_dual_tensor_goal_encoder(rgb, depth, goal, params, *,
                                    pixel_tile=512,
                                    compute_dtype=jnp.bfloat16):
    """Forward pass.

    rgb, depth: (nstep, nsampler, C, H, W)  float32 (NCHW per sample)
    goal:       (nstep, nsampler, 2)        float32
    returns     (nstep, nsampler, 2 * comb_hid[-1] * H * W)
                (adapt_output with use_agent=False, nagent=1)
    """
    nstep, nsampler, C, H, W = rgb.shape
    assert depth.shape == rgb.shape
    B = nstep * nsampler
    P = H * W
    comb_hid0 = params["rgb_w3a"].shape[0]
    comb_out = params["rgb_w4"].shape[0]

    # Channel-major f32 views: NCHW already orders channels before pixels so
    # these reshapes are free, and there is no wrapper-side dtype cast (the
    # bf16 cast happens inside the kernel).
    x_rgb = rgb.reshape(B, C, P)
    x_dep = depth.reshape(B, C, P)

    # Fold goal embedding + combiner goal-weights + combiner bias into one
    # per-sample effective bias, block-ordered [rgb | depth]: (B, 2*hid0, 1).
    g = goal.reshape(B, 2).astype(jnp.float32)
    ge = jnp.dot(g, params["wg"].T, precision="highest") + params["bg"]
    b3_eff = jnp.concatenate(
        [jnp.dot(ge, params[f"{s}_w3b"].T, precision="highest")
         + params[f"{s}_b3"] for s in ("rgb", "depth")],
        axis=1)[:, :, None].astype(jnp.float32)                  # (B, 256, 1)

    # Block-diagonal fused weights: the MXU sees (256,2C),(64,256),(256,64),
    # (64,256) dots instead of eight tiny per-stream ones.
    def wc(n):
        return params[n].astype(compute_dtype)

    def bcol(n):
        return jnp.concatenate(
            [params[f"rgb_{n}"], params[f"depth_{n}"]]
        ).astype(jnp.float32)[:, None]

    w1 = _block_diag(wc("rgb_w1"), wc("depth_w1"))      # (256, 2C)
    w2 = _block_diag(wc("rgb_w2"), wc("depth_w2"))      # (64, 256)
    w3 = _block_diag(wc("rgb_w3a"), wc("depth_w3a"))    # (256, 64)
    w4 = _block_diag(wc("rgb_w4"), wc("depth_w4"))      # (64, 256)
    b1, b2, b4 = bcol("b1"), bcol("b2"), bcol("b4")

    TP, P_pad = _pick_pixel_tile(P, pixel_tile, B, C, 2 * comb_out)
    if P_pad != P:
        pad = ((0, 0), (0, 0), (0, P_pad - P))
        x_rgb = jnp.pad(x_rgb, pad)
        x_dep = jnp.pad(x_dep, pad)
    grid = (B, P_pad // TP)

    x_spec = pl.BlockSpec((None, C, TP), lambda b, j: (b, 0, j))

    def const_spec(a):          # weights / biases: resident constants
        return pl.BlockSpec(a.shape, lambda b, j: (0, 0))

    in_specs = [
        x_spec, x_spec,
        const_spec(w1), const_spec(b1),
        const_spec(w2), const_spec(b2),
        const_spec(w3),
        pl.BlockSpec((None, 2 * comb_hid0, 1), lambda b, j: (b, 0, 0)),
        const_spec(w4), const_spec(b4),
    ]

    out = pl.pallas_call(
        _dual_encoder_kernel,
        out_shape=jax.ShapeDtypeStruct((B, 2 * comb_out, P_pad), jnp.float32),
        grid_spec=pltpu.PrefetchScalarGridSpec(
            num_scalar_prefetch=0,
            grid=grid,
            in_specs=in_specs,
            out_specs=pl.BlockSpec((None, 2 * comb_out, TP),
                                   lambda b, j: (b, 0, j)),
        ),
        compiler_params=pltpu.CompilerParams(
            dimension_semantics=("parallel", "parallel"),
            vmem_limit_bytes=64 * 1024 * 1024),
    )(x_rgb, x_dep, w1, b1, w2, b2, w3, b3_eff, w4, b4)

    if P_pad != P:
        out = out[:, :, :P]
    # torch: cat([rgb_x, depth_x], dim=1).reshape(B, -1) == (B, 2*Cout, H*W)
    # flattened row-major -> identical to out.reshape(B, -1); no layout fixup.
    return out.reshape(nstep, nsampler, -1)


def _reference(rgb, depth, goal, params):
    """Pure-JAX reference replicating the PyTorch forward semantics."""
    nstep, nsampler, C, H, W = rgb.shape
    B = nstep * nsampler
    g = goal.reshape(B, 2)
    ge = jnp.dot(g, params["wg"].T, precision="highest") + params["bg"]

    def conv1x1(x, w, b):            # x (B, Cin, P), w (Cout, Cin)
        return (jnp.einsum("oc,bcp->bop", w, x, precision="highest")
                + b[None, :, None])

    def stream(x, s):
        x = x.reshape(B, C, H * W)
        h1 = jax.nn.relu(conv1x1(x, params[f"{s}_w1"], params[f"{s}_b1"]))
        h2 = jax.nn.relu(conv1x1(h1, params[f"{s}_w2"], params[f"{s}_b2"]))
        # cat([h2, distributed_target], dim=1) through the split combiner conv
        goal_part = jnp.dot(ge, params[f"{s}_w3b"].T, precision="highest")
        c1 = (jnp.einsum("oc,bcp->bop", params[f"{s}_w3a"], h2,
                         precision="highest")
              + goal_part[:, :, None] + params[f"{s}_b3"][None, :, None])
        c1 = jax.nn.relu(c1)
        return conv1x1(c1, params[f"{s}_w4"], params[f"{s}_b4"])

    rgb_x = stream(rgb, "rgb")
    depth_x = stream(depth, "depth")
    x = jnp.concatenate([rgb_x, depth_x], axis=1).reshape(B, -1)
    return x.reshape(nstep, nsampler, -1)


if __name__ == "__main__":
    key = jax.random.PRNGKey(0)
    k_rgb, k_dep, k_goal, k_par = jax.random.split(key, 4)

    nstep, nsampler = 2, 2
    C, H, W = 16, 16, 16          # small stand-in for the resnet feature map
    goal_dims = 32

    rgb = jax.random.normal(k_rgb, (nstep, nsampler, C, H, W), jnp.float32)
    depth = jax.random.normal(k_dep, (nstep, nsampler, C, H, W), jnp.float32)
    goal = jax.random.normal(k_goal, (nstep, nsampler, 2), jnp.float32)
    params = init_params(k_par, C, goal_dims=goal_dims)

    ref = _reference(rgb, depth, goal, params)

    # Default path: bf16 MXU operands on all generations (f32 accumulation,
    # f32 bias/ReLU epilogue, in-kernel activation cast).
    out_bf16 = resnet_dual_tensor_goal_encoder(rgb, depth, goal, params)
    out_bf16 = jax.block_until_ready(out_bf16)
    assert out_bf16.shape == (nstep, nsampler, 2 * 32 * H * W), out_bf16.shape
    assert jnp.allclose(out_bf16, ref, atol=2e-2, rtol=2e-2)

    # f32 operand path (default MXU precision; see kernel note on precision).
    out_f32 = resnet_dual_tensor_goal_encoder(
        rgb, depth, goal, params, compute_dtype=jnp.float32)
    out_f32 = jax.block_until_ready(out_f32)
    assert jnp.allclose(out_f32, ref, atol=1e-4, rtol=1e-4)

    print("KERNEL_OK")
</pallas_src>

<mosaic_0001>
module attributes {stable_mosaic.version = 11 : i64} {
  func.func @_dual_encoder_kernel(%arg0: i32, %arg1: i32, %arg2: memref<1x16x128xf32, #tpu.memory_space<vmem>>, %arg3: memref<1x16x128xf32, #tpu.memory_space<vmem>>, %arg4: memref<256x32xbf16, #tpu.memory_space<vmem>>, %arg5: memref<256x1xf32, #tpu.memory_space<vmem>>, %arg6: memref<64x256xbf16, #tpu.memory_space<vmem>>, %arg7: memref<64x1xf32, #tpu.memory_space<vmem>>, %arg8: memref<256x64xbf16, #tpu.memory_space<vmem>>, %arg9: memref<1x256x1xf32, #tpu.memory_space<vmem>>, %arg10: memref<64x256xbf16, #tpu.memory_space<vmem>>, %arg11: memref<64x1xf32, #tpu.memory_space<vmem>>, %arg12: memref<1x64x128xf32, #tpu.memory_space<vmem>>) attributes {dimension_semantics = [#tpu.dimension_semantics<parallel>, #tpu.dimension_semantics<parallel>], iteration_bounds = array<i64: 4, 2>, scalar_prefetch = 0 : i64, scratch_operands = 0 : i64, tpu.core_type = #tpu.core_type<tc>, window_params = [{transform_indices = @transform_0, window_bounds = array<i64: 1, 16, 128>}, {transform_indices = @transform_1, window_bounds = array<i64: 1, 16, 128>}, {pipeline_mode = #tpu.pipeline_mode<synchronous>, transform_indices = @transform_2, window_bounds = array<i64: 256, 32>}, {pipeline_mode = #tpu.pipeline_mode<synchronous>, transform_indices = @transform_3, window_bounds = array<i64: 256, 1>}, {pipeline_mode = #tpu.pipeline_mode<synchronous>, transform_indices = @transform_4, window_bounds = array<i64: 64, 256>}, {pipeline_mode = #tpu.pipeline_mode<synchronous>, transform_indices = @transform_5, window_bounds = array<i64: 64, 1>}, {pipeline_mode = #tpu.pipeline_mode<synchronous>, transform_indices = @transform_6, window_bounds = array<i64: 256, 64>}, {transform_indices = @transform_7, window_bounds = array<i64: 1, 256, 1>}, {pipeline_mode = #tpu.pipeline_mode<synchronous>, transform_indices = @transform_8, window_bounds = array<i64: 64, 256>}, {pipeline_mode = #tpu.pipeline_mode<synchronous>, transform_indices = @transform_9, window_bounds = array<i64: 64, 1>}, {transform_indices = @transform_10, window_bounds = array<i64: 1, 64, 128>}]} {
    %c0 = arith.constant 0 : index
    %c0_0 = arith.constant 0 : index
    %c0_1 = arith.constant 0 : index
    %0 = vector.load %arg2[%c0, %c0_0, %c0_1] : memref<1x16x128xf32, #tpu.memory_space<vmem>>, vector<1x16x128xf32>
    %1 = vector.shape_cast %0 : vector<1x16x128xf32> to vector<16x128xf32>
    %2 = arith.truncf %1 : vector<16x128xf32> to vector<16x128xbf16>
    %c0_2 = arith.constant 0 : index
    %c0_3 = arith.constant 0 : index
    %c0_4 = arith.constant 0 : index
    %3 = vector.load %arg3[%c0_2, %c0_3, %c0_4] : memref<1x16x128xf32, #tpu.memory_space<vmem>>, vector<1x16x128xf32>
    %4 = vector.shape_cast %3 : vector<1x16x128xf32> to vector<16x128xf32>
    %5 = arith.truncf %4 : vector<16x128xf32> to vector<16x128xbf16>
    %6 = tpu.concatenate %2, %5 in 0 : vector<16x128xbf16>, vector<16x128xbf16> -> vector<32x128xbf16>
    %c0_5 = arith.constant 0 : index
    %c0_6 = arith.constant 0 : index
    %7 = vector.load %arg4[%c0_5, %c0_6] : memref<256x32xbf16, #tpu.memory_space<vmem>>, vector<256x32xbf16>
    %cst = arith.constant dense<0.000000e+00> : vector<256x128xf32>
    %8 = tpu.matmul %7, %6, %cst {dimension_numbers = #tpu.dot_dimension_numbers<[1], [0], [0], [1], [0, 0, 1, 1], [], []>} : vector<256x32xbf16>, vector<32x128xbf16>, vector<256x128xf32> -> vector<256x128xf32>
    %c0_7 = arith.constant 0 : index
    %c0_8 = arith.constant 0 : index
    %9 = vector.load %arg5[%c0_7, %c0_8] : memref<256x1xf32, #tpu.memory_space<vmem>>, vector<256x1xf32>
    %10 = vector.broadcast %9 : vector<256x1xf32> to vector<256x128xf32>
    %11 = arith.addf %8, %10 : vector<256x128xf32>
    %cst_9 = arith.constant 0.000000e+00 : f32
    %12 = vector.broadcast %cst_9 : f32 to vector<256x128xf32>
    %13 = arith.maximumf %11, %12 : vector<256x128xf32>
    %14 = arith.truncf %13 : vector<256x128xf32> to vector<256x128xbf16>
    %c0_10 = arith.constant 0 : index
    %c0_11 = arith.constant 0 : index
    %15 = vector.load %arg6[%c0_10, %c0_11] : memref<64x256xbf16, #tpu.memory_space<vmem>>, vector<64x256xbf16>
    %cst_12 = arith.constant dense<0.000000e+00> : vector<64x128xf32>
    %16 = tpu.matmul %15, %14, %cst_12 {dimension_numbers = #tpu.dot_dimension_numbers<[1], [0], [0], [1], [0, 0, 1, 1], [], []>} : vector<64x256xbf16>, vector<256x128xbf16>, vector<64x128xf32> -> vector<64x128xf32>
    %c0_13 = arith.constant 0 : index
    %c0_14 = arith.constant 0 : index
    %17 = vector.load %arg7[%c0_13, %c0_14] : memref<64x1xf32, #tpu.memory_space<vmem>>, vector<64x1xf32>
    %18 = vector.broadcast %17 : vector<64x1xf32> to vector<64x128xf32>
    %19 = arith.addf %16, %18 : vector<64x128xf32>
    %cst_15 = arith.constant 0.000000e+00 : f32
    %20 = vector.broadcast %cst_15 : f32 to vector<64x128xf32>
    %21 = arith.maximumf %19, %20 : vector<64x128xf32>
    %22 = arith.truncf %21 : vector<64x128xf32> to vector<64x128xbf16>
    %c0_16 = arith.constant 0 : index
    %c0_17 = arith.constant 0 : index
    %23 = vector.load %arg8[%c0_16, %c0_17] : memref<256x64xbf16, #tpu.memory_space<vmem>>, vector<256x64xbf16>
    %cst_18 = arith.constant dense<0.000000e+00> : vector<256x128xf32>
    %24 = tpu.matmul %23, %22, %cst_18 {dimension_numbers = #tpu.dot_dimension_numbers<[1], [0], [0], [1], [0, 0, 1, 1], [], []>} : vector<256x64xbf16>, vector<64x128xbf16>, vector<256x128xf32> -> vector<256x128xf32>
    %c0_19 = arith.constant 0 : index
    %c0_20 = arith.constant 0 : index
    %c0_21 = arith.constant 0 : index
    %25 = vector.load %arg9[%c0_19, %c0_20, %c0_21] : memref<1x256x1xf32, #tpu.memory_space<vmem>>, vector<1x256x1xf32>
    %26 = vector.shape_cast %25 : vector<1x256x1xf32> to vector<256x1xf32>
    %27 = vector.broadcast %26 : vector<256x1xf32> to vector<256x128xf32>
    %28 = arith.addf %24, %27 : vector<256x128xf32>
    %cst_22 = arith.constant 0.000000e+00 : f32
    %29 = vector.broadcast %cst_22 : f32 to vector<256x128xf32>
    %30 = arith.maximumf %28, %29 : vector<256x128xf32>
    %31 = arith.truncf %30 : vector<256x128xf32> to vector<256x128xbf16>
    %c0_23 = arith.constant 0 : index
    %c0_24 = arith.constant 0 : index
    %32 = vector.load %arg10[%c0_23, %c0_24] : memref<64x256xbf16, #tpu.memory_space<vmem>>, vector<64x256xbf16>
    %cst_25 = arith.constant dense<0.000000e+00> : vector<64x128xf32>
    %33 = tpu.matmul %32, %31, %cst_25 {dimension_numbers = #tpu.dot_dimension_numbers<[1], [0], [0], [1], [0, 0, 1, 1], [], []>} : vector<64x256xbf16>, vector<256x128xbf16>, vector<64x128xf32> -> vector<64x128xf32>
    %c0_26 = arith.constant 0 : index
    %c0_27 = arith.constant 0 : index
    %34 = vector.load %arg11[%c0_26, %c0_27] : memref<64x1xf32, #tpu.memory_space<vmem>>, vector<64x1xf32>
    %35 = vector.broadcast %34 : vector<64x1xf32> to vector<64x128xf32>
    %36 = arith.addf %33, %35 : vector<64x128xf32>
    %c0_28 = arith.constant 0 : index
    %c0_29 = arith.constant 0 : index
    %c0_30 = arith.constant 0 : index
    %37 = vector.load %arg12[%c0_28, %c0_29, %c0_30] : memref<1x64x128xf32, #tpu.memory_space<vmem>>, vector<1x64x128xf32>
    %38 = vector.shape_cast %37 : vector<1x64x128xf32> to vector<64x128xf32>
    %39 = vector.shape_cast %36 : vector<64x128xf32> to vector<1x64x128xf32>
    tpu.vector_store %arg12[%c0_28, %c0_29, %c0_30], %39 {strides = array<i32>} : memref<1x64x128xf32, #tpu.memory_space<vmem>>, vector<1x64x128xf32>,
    return
  }
  func.func @transform_0(%arg0: i32, %arg1: i32) -> (i32, i32, i32) {
    %c0_i32 = arith.constant 0 : i32
    %c0_i32_0 = arith.constant 0 : i32
    return %arg0, %c0_i32, %arg1 : i32, i32, i32
  }
  func.func @transform_1(%arg0: i32, %arg1: i32) -> (i32, i32, i32) {
    %c0_i32 = arith.constant 0 : i32
    %c0_i32_0 = arith.constant 0 : i32
    return %arg0, %c0_i32, %arg1 : i32, i32, i32
  }
  func.func @transform_2(%arg0: i32, %arg1: i32) -> (i32, i32) {
    %c0_i32 = arith.constant 0 : i32
    %c0_i32_0 = arith.constant 0 : i32
    %c0_i32_1 = arith.constant 0 : i32
    return %c0_i32, %c0_i32_0 : i32, i32
  }
  func.func @transform_3(%arg0: i32, %arg1: i32) -> (i32, i32) {
    %c0_i32 = arith.constant 0 : i32
    %c0_i32_0 = arith.constant 0 : i32
    %c0_i32_1 = arith.constant 0 : i32
    return %c0_i32, %c0_i32_0 : i32, i32
  }
  func.func @transform_4(%arg0: i32, %arg1: i32) -> (i32, i32) {
    %c0_i32 = arith.constant 0 : i32
    %c0_i32_0 = arith.constant 0 : i32
    %c0_i32_1 = arith.constant 0 : i32
    return %c0_i32, %c0_i32_0 : i32, i32
  }
  func.func @transform_5(%arg0: i32, %arg1: i32) -> (i32, i32) {
    %c0_i32 = arith.constant 0 : i32
    %c0_i32_0 = arith.constant 0 : i32
    %c0_i32_1 = arith.constant 0 : i32
    return %c0_i32, %c0_i32_0 : i32, i32
  }
  func.func @transform_6(%arg0: i32, %arg1: i32) -> (i32, i32) {
    %c0_i32 = arith.constant 0 : i32
    %c0_i32_0 = arith.constant 0 : i32
    %c0_i32_1 = arith.constant 0 : i32
    return %c0_i32, %c0_i32_0 : i32, i32
  }
  func.func @transform_7(%arg0: i32, %arg1: i32) -> (i32, i32, i32) {
    %c0_i32 = arith.constant 0 : i32
    %c0_i32_0 = arith.constant 0 : i32
    %c0_i32_1 = arith.constant 0 : i32
    return %arg0, %c0_i32, %c0_i32_0 : i32, i32, i32
  }
  func.func @transform_8(%arg0: i32, %arg1: i32) -> (i32, i32) {
    %c0_i32 = arith.constant 0 : i32
    %c0_i32_0 = arith.constant 0 : i32
    %c0_i32_1 = arith.constant 0 : i32
    return %c0_i32, %c0_i32_0 : i32, i32
  }
  func.func @transform_9(%arg0: i32, %arg1: i32) -> (i32, i32) {
    %c0_i32 = arith.constant 0 : i32
    %c0_i32_0 = arith.constant 0 : i32
    %c0_i32_1 = arith.constant 0 : i32
    return %c0_i32, %c0_i32_0 : i32, i32
  }
  func.func @transform_10(%arg0: i32, %arg1: i32) -> (i32, i32, i32) {
    %c0_i32 = arith.constant 0 : i32
    %c0_i32_0 = arith.constant 0 : i32
    return %arg0, %c0_i32, %arg1 : i32, i32, i32
  }
}

</mosaic_0001>

<llo_original>
// kernel: tpu_custom_call.1
$region0: #{tpu_custom_call.1}
  #allocation0 [shape = 'u32[]', space=smem, size = 0x4, offset = 0x4, fixed_abs, tag = 'smem constant byte address 0x4 - core index']
  #allocation1 [shape = 'u32[144,128]{1,0:T(1,128)}', space=vmem, size = 0x12000, scoped, tag = 'internal scratch']
  %s0 = inlined_call_operand.hbm [shape: f32[4,16,256], index: 0, kind: input, shape index: {}]
  %s1 = inlined_call_operand.hbm [shape: f32[4,16,256], index: 1, kind: input, shape index: {}]
  %s2 = inlined_call_operand.hbm [shape: bf16[256,32], index: 2, kind: input, shape index: {}]
  %s3 = inlined_call_operand.hbm [shape: f32[256,1], index: 3, kind: input, shape index: {}]
  %s4 = inlined_call_operand.hbm [shape: bf16[64,256], index: 4, kind: input, shape index: {}]
  %s5 = inlined_call_operand.hbm [shape: f32[64,1], index: 5, kind: input, shape index: {}]
  %s6 = inlined_call_operand.hbm [shape: bf16[256,64], index: 6, kind: input, shape index: {}]
  %s7 = inlined_call_operand.hbm [shape: f32[4,256,1], index: 7, kind: input, shape index: {}]
  %s8 = inlined_call_operand.hbm [shape: bf16[64,256], index: 8, kind: input, shape index: {}]
  %s9 = inlined_call_operand.hbm [shape: f32[64,1], index: 9, kind: input, shape index: {}]
  %s10 = inlined_call_operand.hbm [shape: f32[4,64,256], index: 10, kind: output, shape index: {}]
  %s11 = sld [smem:[#allocation0]]
  $region113: #{tpu_custom_call.1} parent=0
    _
  %s13 = ssub.s32 1, %s11
  %s14 = scalar_select 0, %s13, %s11
  $region1: #{tpu_custom_call.1} parent=0
    #allocation2 [shape = 'u8[16384]{0}', space=vmem, size = 0x4000, scoped, tag = 'input window, operand 0']
    #allocation3 [shape = 's32[2]{0}', space=sflag, size = 0x8, scoped, tag = 'scoped memory for tpu_custom_call.1']
    #allocation4 [shape = 's32[2]{0}', space=sflag, size = 0x8, scoped, tag = 'scoped memory for tpu_custom_call.1']
    #allocation5 [shape = 'u8[16384]{0}', space=vmem, size = 0x4000, scoped, tag = 'input window, operand 1']
    #allocation6 [shape = 's32[2]{0}', space=sflag, size = 0x8, scoped, tag = 'scoped memory for tpu_custom_call.1']
    #allocation7 [shape = 'u8[65536]{0}', space=vmem, size = 0x10000, scoped, tag = 'input window, operand 2, single buffered']
    #allocation8 [shape = 'u8[131072]{0}', space=vmem, size = 0x20000, scoped, tag = 'input window, operand 3, single buffered']
    #allocation9 [shape = 's32[1]{0}', space=sflag, size = 0x4, scoped, tag = 'scoped memory for tpu_custom_call.1']
    #allocation10 [shape = 'u8[32768]{0}', space=vmem, size = 0x8000, scoped, tag = 'input window, operand 4, single buffered']
    #allocation11 [shape = 'u8[32768]{0}', space=vmem, size = 0x8000, scoped, tag = 'input window, operand 5, single buffered']
    #allocation12 [shape = 's32[1]{0}', space=sflag, size = 0x4, scoped, tag = 'scoped memory for tpu_custom_call.1']
    #allocation13 [shape = 'u8[65536]{0}', space=vmem, size = 0x10000, scoped, tag = 'input window, operand 6, single buffered']
    #allocation14 [shape = 'u8[262144]{0}', space=vmem, size = 0x40000, scoped, tag = 'input window, operand 7']
    #allocation15 [shape = 's32[2]{0}', space=sflag, size = 0x8, scoped, tag = 'scoped memory for tpu_custom_call.1']
    #allocation16 [shape = 'u8[32768]{0}', space=vmem, size = 0x8000, scoped, tag = 'input window, operand 8, single buffered']
    #allocation17 [shape = 'u8[32768]{0}', space=vmem, size = 0x8000, scoped, tag = 'input window, operand 9, single buffered']
    #allocation18 [shape = 's32[1]{0}', space=sflag, size = 0x4, scoped, tag = 'scoped memory for tpu_custom_call.1']
    #allocation19 [shape = 'u8[65536]{0}', space=vmem, size = 0x10000, scoped, tag = 'output window, operand 0']
    %15 = vsyncpa [#allocation3], 0
    %s16 = scalar_lea.sflag [#allocation3], 1
    %17 = vsyncpa %s16, 0
    %18 = vsyncpa [#allocation6], 0
    %s19 = scalar_lea.sflag [#allocation6], 1
    %20 = vsyncpa %s19, 0
    %21 = vsyncpa [#allocation9], 0
    %22 = vsyncpa [#allocation12], 0
    %23 = vsyncpa [#allocation15], 0
    %s24 = scalar_lea.sflag [#allocation15], 1
    %25 = vsyncpa %s24, 0
    %26 = vsyncpa [#allocation18], 0
    %27 = vsyncpa [#allocation4], 0
    %s28 = scalar_lea.sflag [#allocation4], 1
    %29 = vsyncpa %s28, 0
    loop: start=0, step=1, limit=10
    $region2: #{tpu_custom_call.1} parent=1 // loop_pre_header
      _
    $region3: #{tpu_custom_call.1} parent=1 // loop_header
      %s31 = sphi 0, %s35
      %p32 = scmp.ge.s32.totalorder %s31, 10
      %s38 = sphi 0, %s50
      %s39 = sphi 0, %s46
      %s40 = sphi 0, %s38
      %s41 = sphi 0, %s39
      %s42 = sphi 0, %s40
      %s43 = sphi 0, %s41
      %s55 = sphi 0, %s57
      %s58 = sphi 0, %s55
      %s59 = sphi 0, %s58
      %s75 = sphi 0, %s59
      %s83 = sphi 0, %s85
      %s86 = sphi 0, %s83
      %s87 = sphi 0, %s86
      %s103 = sphi 0, %s87
      %s107 = sphi 0, %s107
      %s109 = sphi 0, %s107
      %s110 = sphi 0, %s109
      %s124 = sphi 0, %s110
      %s128 = sphi 0, %s128
      %s130 = sphi 0, %s128
      %s131 = sphi 0, %s130
      %s145 = sphi 0, %s131
      %s149 = sphi 0, %s149
      %s151 = sphi 0, %s149
      %s152 = sphi 0, %s151
      %s166 = sphi 0, %s152
      %s170 = sphi 0, %s170
      %s172 = sphi 0, %s170
      %s173 = sphi 0, %s172
      %s187 = sphi 0, %s173
      %s191 = sphi 0, %s191
      %s193 = sphi 0, %s191
      %s194 = sphi 0, %s193
      %s208 = sphi 0, %s194
      %s214 = sphi 0, %s216
      %s217 = sphi 0, %s214
      %s218 = sphi 0, %s217
      %s234 = sphi 0, %s218
      %s238 = sphi 0, %s238
      %s240 = sphi 0, %s238
      %s241 = sphi 0, %s240
      %s255 = sphi 0, %s241
      %s259 = sphi 0, %s259
      %s261 = sphi 0, %s259
      %s262 = sphi 0, %s261
      %s276 = sphi 0, %s262
      %s284 = sphi 0, %s286
      %s287 = sphi 0, %s284
      %s288 = sphi 0, %s287
      %s304 = sphi 0, %s288
    $region4: #{tpu_custom_call.1} parent=1 // loop_header_branch
      %34 = sbr.rel (%p32) target = $region8
    $region5: #{tpu_custom_call.1} parent=1 // loop_body
      %s36 = ssub.s32 %s31, 1
      %s37 = ssub.s32 %s31, 2
      %s44 = sadd.s32 1, %s39
      %p45 = scmp.ge.s32.totalorder %s44, 2
      %s46 = scalar_select %p45, 0, %s44
      %s47 = sadd.s32 1, %s38
      %s48 = scalar_select %p45, %s47, %s38
      %p49 = scmp.ge.s32.totalorder %s48, 4
      %s50 = scalar_select %p49, 0, %s48
      %s51 = ssub.s32 %s38, %s50
      %s52 = ssub.s32 %s39, %s46
      %s53 = sor.u32 %s51, %s52
      %p54 = scmp.eq.s32.totalorder %s53, 0
      %s56 = sadd.s32 %s55, 1
      %s57 = scalar_select %p54, %s55, %s56
      %p60 = pneg %p54
      %p61 = scmp.eq.s32.totalorder %s31, 7
      %p62 = por %p60, %p61
      %p63 = scmp.ne.s32.totalorder %s55, %s58
      %p64 = scmp.eq.s32.totalorder %s31, 0
      %p65 = por %p63, %p64
      %p66 = scmp.ne.s32.totalorder %s55, %s58
      %p67 = scmp.eq.s32.totalorder %s36, 7
      %p68 = por %p66, %p67
      %p69 = scmp.ne.s32.totalorder %s58, %s59
      %p70 = scmp.eq.s32.totalorder %s36, 0
      %p71 = por %p69, %p70
      %p72 = scmp.ne.s32.totalorder %s58, %s59
      %p73 = scmp.eq.s32.totalorder %s37, 7
      %p74 = por %p72, %p73
      %p76 = scmp.ne.s32.totalorder %s59, %s75
      %p77 = scmp.eq.s32.totalorder %s37, 0
      %p78 = por %p76, %p77
      %s79 = ssub.s32 %s38, %s50
      %s80 = ssub.s32 %s39, %s46
      %s81 = sor.u32 %s79, %s80
      %p82 = scmp.eq.s32.totalorder %s81, 0
      %s84 = sadd.s32 %s83, 1
      %s85 = scalar_select %p82, %s83, %s84
      %p88 = pneg %p82
      %p89 = scmp.eq.s32.totalorder %s31, 7
      %p90 = por %p88, %p89
      %p91 = scmp.ne.s32.totalorder %s83, %s86
      %p92 = scmp.eq.s32.totalorder %s31, 0
      %p93 = por %p91, %p92
      %p94 = scmp.ne.s32.totalorder %s83, %s86
      %p95 = scmp.eq.s32.totalorder %s36, 7
      %p96 = por %p94, %p95
      %p97 = scmp.ne.s32.totalorder %s86, %s87
      %p98 = scmp.eq.s32.totalorder %s36, 0
      %p99 = por %p97, %p98
      %p100 = scmp.ne.s32.totalorder %s86, %s87
      %p101 = scmp.eq.s32.totalorder %s37, 7
      %p102 = por %p100, %p101
      %p104 = scmp.ne.s32.totalorder %s87, %s103
      %p105 = scmp.eq.s32.totalorder %s37, 0
      %p106 = por %p104, %p105
      %s108 = sadd.s32 %s107, 1
      %p111 = scmp.eq.s32.totalorder %s31, 7
      %p112 = scmp.ne.s32.totalorder %s107, %s109
      %p113 = scmp.eq.s32.totalorder %s31, 0
      %p114 = por %p112, %p113
      %p115 = scmp.ne.s32.totalorder %s107, %s109
      %p116 = scmp.eq.s32.totalorder %s36, 7
      %p117 = por %p115, %p116
      %p118 = scmp.ne.s32.totalorder %s109, %s110
      %p119 = scmp.eq.s32.totalorder %s36, 0
      %p120 = por %p118, %p119
      %p121 = scmp.ne.s32.totalorder %s109, %s110
      %p122 = scmp.eq.s32.totalorder %s37, 7
      %p123 = por %p121, %p122
      %p125 = scmp.ne.s32.totalorder %s110, %s124
      %p126 = scmp.eq.s32.totalorder %s37, 0
      %p127 = por %p125, %p126
      %s129 = sadd.s32 %s128, 1
      %p132 = scmp.eq.s32.totalorder %s31, 7
      %p133 = scmp.ne.s32.totalorder %s128, %s130
      %p134 = scmp.eq.s32.totalorder %s31, 0
      %p135 = por %p133, %p134
      %p136 = scmp.ne.s32.totalorder %s128, %s130
      %p137 = scmp.eq.s32.totalorder %s36, 7
      %p138 = por %p136, %p137
      %p139 = scmp.ne.s32.totalorder %s130, %s131
      %p140 = scmp.eq.s32.totalorder %s36, 0
      %p141 = por %p139, %p140
      %p142 = scmp.ne.s32.totalorder %s130, %s131
      %p143 = scmp.eq.s32.totalorder %s37, 7
      %p144 = por %p142, %p143
      %p146 = scmp.ne.s32.totalorder %s131, %s145
      %p147 = scmp.eq.s32.totalorder %s37, 0
      %p148 = por %p146, %p147
      %s150 = sadd.s32 %s149, 1
      %p153 = scmp.eq.s32.totalorder %s31, 7
      %p154 = scmp.ne.s32.totalorder %s149, %s151
      %p155 = scmp.eq.s32.totalorder %s31, 0
      %p156 = por %p154, %p155
      %p157 = scmp.ne.s32.totalorder %s149, %s151
      %p158 = scmp.eq.s32.totalorder %s36, 7
      %p159 = por %p157, %p158
      %p160 = scmp.ne.s32.totalorder %s151, %s152
      %p161 = scmp.eq.s32.totalorder %s36, 0
      %p162 = por %p160, %p161
      %p163 = scmp.ne.s32.totalorder %s151, %s152
      %p164 = scmp.eq.s32.totalorder %s37, 7
      %p165 = por %p163, %p164
      %p167 = scmp.ne.s32.totalorder %s152, %s166
      %p168 = scmp.eq.s32.totalorder %s37, 0
      %p169 = por %p167, %p168
      %s171 = sadd.s32 %s170, 1
      %p174 = scmp.eq.s32.totalorder %s31, 7
      %p175 = scmp.ne.s32.totalorder %s170, %s172
      %p176 = scmp.eq.s32.totalorder %s31, 0
      %p177 = por %p175, %p176
      %p178 = scmp.ne.s32.totalorder %s170, %s172
      %p179 = scmp.eq.s32.totalorder %s36, 7
      %p180 = por %p178, %p179
      %p181 = scmp.ne.s32.totalorder %s172, %s173
      %p182 = scmp.eq.s32.totalorder %s36, 0
      %p183 = por %p181, %p182
      %p184 = scmp.ne.s32.totalorder %s172, %s173
      %p185 = scmp.eq.s32.totalorder %s37, 7
      %p186 = por %p184, %p185
      %p188 = scmp.ne.s32.totalorder %s173, %s187
      %p189 = scmp.eq.s32.totalorder %s37, 0
      %p190 = por %p188, %p189
      %s192 = sadd.s32 %s191, 1
      %p195 = scmp.eq.s32.totalorder %s31, 7
      %p196 = scmp.ne.s32.totalorder %s191, %s193
      %p197 = scmp.eq.s32.totalorder %s31, 0
      %p198 = por %p196, %p197
      %p199 = scmp.ne.s32.totalorder %s191, %s193
      %p200 = scmp.eq.s32.totalorder %s36, 7
      %p201 = por %p199, %p200
      %p202 = scmp.ne.s32.totalorder %s193, %s194
      %p203 = scmp.eq.s32.totalorder %s36, 0
      %p204 = por %p202, %p203
      %p205 = scmp.ne.s32.totalorder %s193, %s194
      %p206 = scmp.eq.s32.totalorder %s37, 7
      %p207 = por %p205, %p206
      %p209 = scmp.ne.s32.totalorder %s194, %s208
      %p210 = scmp.eq.s32.totalorder %s37, 0
      %p211 = por %p209, %p210
      %s212 = ssub.s32 %s38, %s50
      %p213 = scmp.eq.s32.totalorder %s212, 0
      %s215 = sadd.s32 %s214, 1
      %s216 = scalar_select %p213, %s214, %s215
      %p219 = pneg %p213
      %p220 = scmp.eq.s32.totalorder %s31, 7
      %p221 = por %p219, %p220
      %p222 = scmp.ne.s32.totalorder %s214, %s217
      %p223 = scmp.eq.s32.totalorder %s31, 0
      %p224 = por %p222, %p223
      %p225 = scmp.ne.s32.totalorder %s214, %s217
      %p226 = scmp.eq.s32.totalorder %s36, 7
      %p227 = por %p225, %p226
      %p228 = scmp.ne.s32.totalorder %s217, %s218
      %p229 = scmp.eq.s32.totalorder %s36, 0
      %p230 = por %p228, %p229
      %p231 = scmp.ne.s32.totalorder %s217, %s218
      %p232 = scmp.eq.s32.totalorder %s37, 7
      %p233 = por %p231, %p232
      %p235 = scmp.ne.s32.totalorder %s218, %s234
      %p236 = scmp.eq.s32.totalorder %s37, 0
      %p237 = por %p235, %p236
      %s239 = sadd.s32 %s238, 1
      %p242 = scmp.eq.s32.totalorder %s31, 7
      %p243 = scmp.ne.s32.totalorder %s238, %s240
      %p244 = scmp.eq.s32.totalorder %s31, 0
      %p245 = por %p243, %p244
      %p246 = scmp.ne.s32.totalorder %s238, %s240
      %p247 = scmp.eq.s32.totalorder %s36, 7
      %p248 = por %p246, %p247
      %p249 = scmp.ne.s32.totalorder %s240, %s241
      %p250 = scmp.eq.s32.totalorder %s36, 0
      %p251 = por %p249, %p250
      %p252 = scmp.ne.s32.totalorder %s240, %s241
      %p253 = scmp.eq.s32.totalorder %s37, 7
      %p254 = por %p252, %p253
      %p256 = scmp.ne.s32.totalorder %s241, %s255
      %p257 = scmp.eq.s32.totalorder %s37, 0
      %p258 = por %p256, %p257
      %s260 = sadd.s32 %s259, 1
      %p263 = scmp.eq.s32.totalorder %s31, 7
      %p264 = scmp.ne.s32.totalorder %s259, %s261
      %p265 = scmp.eq.s32.totalorder %s31, 0
      %p266 = por %p264, %p265
      %p267 = scmp.ne.s32.totalorder %s259, %s261
      %p268 = scmp.eq.s32.totalorder %s36, 7
      %p269 = por %p267, %p268
      %p270 = scmp.ne.s32.totalorder %s261, %s262
      %p271 = scmp.eq.s32.totalorder %s36, 0
      %p272 = por %p270, %p271
      %p273 = scmp.ne.s32.totalorder %s261, %s262
      %p274 = scmp.eq.s32.totalorder %s37, 7
      %p275 = por %p273, %p274
      %p277 = scmp.ne.s32.totalorder %s262, %s276
      %p278 = scmp.eq.s32.totalorder %s37, 0
      %p279 = por %p277, %p278
      %s280 = ssub.s32 %s38, %s50
      %s281 = ssub.s32 %s39, %s46
      %s282 = sor.u32 %s280, %s281
      %p283 = scmp.eq.s32.totalorder %s282, 0
      %s285 = sadd.s32 %s284, 1
      %s286 = scalar_select %p283, %s284, %s285
      %p289 = pneg %p283
      %p290 = scmp.eq.s32.totalorder %s31, 7
      %p291 = por %p289, %p290
      %p292 = scmp.ne.s32.totalorder %s284, %s287
      %p293 = scmp.eq.s32.totalorder %s31, 0
      %p294 = por %p292, %p293
      %p295 = scmp.ne.s32.totalorder %s284, %s287
      %p296 = scmp.eq.s32.totalorder %s36, 7
      %p297 = por %p295, %p296
      %p298 = scmp.ne.s32.totalorder %s287, %s288
      %p299 = scmp.eq.s32.totalorder %s36, 0
      %p300 = por %p298, %p299
      %p301 = scmp.ne.s32.totalorder %s287, %s288
      %p302 = scmp.eq.s32.totalorder %s37, 7
      %p303 = por %p301, %p302
      %p305 = scmp.ne.s32.totalorder %s288, %s304
      %p306 = scmp.eq.s32.totalorder %s37, 0
      %p307 = por %p305, %p306
      %p308 = scmp.le.s32.totalorder 1, %s31
      %p309 = scmp.lt.s32.totalorder %s31, 9
      %p310 = pnand %p308, %p309
      %p311 = pneg %p310
      // Predicated region
      $region9: #{tpu_custom_call.1} parent=5 // pred_check
        _
      $region10: #{tpu_custom_call.1} parent=5 // pred_check_branch
        %313 = sbr.rel (%p310) target = $region12
      $region11: #{tpu_custom_call.1} parent=5 // pred_region
        %s314 = ssub.s32 %s31, 1
        // Predicated region
        $region13: #{tpu_custom_call.1} parent=11 // pred_check
          %p315 = pneg %p120
        $region14: #{tpu_custom_call.1} parent=11 // pred_check_branch
          %317 = sbr.rel (%p315) target = $region16
        $region15: #{tpu_custom_call.1} parent=11 // pred_region
          %s319 = ssub.s32 2048, 2048
          %320 = vsyncadd [#allocation6], %s319
          %s321 = sshll.u32 [#allocation7], 4
          %s322 = int_to_ptr.vmem [resolvable:$true] %s321
          %327 = dma.hbm_to_vmem [thread:$0]  %s2, 2048, %s322, [#allocation6], 64, 64, 4
        $region16: #{tpu_custom_call.1} parent=11 // pred_fallthru
          _
        // Predicated region
        $region17: #{tpu_custom_call.1} parent=11 // pred_check
          %p328 = pneg %p141
        $region18: #{tpu_custom_call.1} parent=11 // pred_check_branch
          %330 = sbr.rel (%p328) target = $region20
        $region19: #{tpu_custom_call.1} parent=11 // pred_region
          %s332 = ssub.s32 4096, 4096
          %333 = vsyncadd [#allocation9], %s332
          %s334 = sshll.u32 [#allocation8], 4
          %s335 = int_to_ptr.vmem [resolvable:$true] %s334
          %340 = dma.hbm_to_vmem [thread:$0]  %s3, 4096, %s335, [#allocation9], 128, 128, 8
        $region20: #{tpu_custom_call.1} parent=11 // pred_fallthru
          _
        // Predicated region
        $region21: #{tpu_custom_call.1} parent=11 // pred_check
          %p341 = pneg %p162
        $region22: #{tpu_custom_call.1} parent=11 // pred_check_branch
          %343 = sbr.rel (%p341) target = $region24
        $region23: #{tpu_custom_call.1} parent=11 // pred_region
          %s345 = ssub.s32 1024, 1024
          %346 = vsyncadd [#allocation9], %s345
          %s347 = sshll.u32 [#allocation10], 4
          %s348 = int_to_ptr.vmem [resolvable:$true] %s347
          %353 = dma.hbm_to_vmem [thread:$0]  %s4, 1024, %s348, [#allocation9], 128, 128, 8
        $region24: #{tpu_custom_call.1} parent=11 // pred_fallthru
          _
        // Predicated region
        $region25: #{tpu_custom_call.1} parent=11 // pred_check
          %p354 = pneg %p183
        $region26: #{tpu_custom_call.1} parent=11 // pred_check_branch
          %356 = sbr.rel (%p354) target = $region28
        $region27: #{tpu_custom_call.1} parent=11 // pred_region
          %s358 = ssub.s32 1024, 1024
          %359 = vsyncadd [#allocation12], %s358
          %s360 = sshll.u32 [#allocation11], 4
          %s361 = int_to_ptr.vmem [resolvable:$true] %s360
          %366 = dma.hbm_to_vmem [thread:$0]  %s5, 1024, %s361, [#allocation12], 128, 128, 8
        $region28: #{tpu_custom_call.1} parent=11 // pred_fallthru
          _
        // Predicated region
        $region29: #{tpu_custom_call.1} parent=11 // pred_check
          %p367 = pneg %p204
        $region30: #{tpu_custom_call.1} parent=11 // pred_check_branch
          %369 = sbr.rel (%p367) target = $region32
        $region31: #{tpu_custom_call.1} parent=11 // pred_region
          %s371 = ssub.s32 2048, 2048
          %372 = vsyncadd [#allocation12], %s371
          %s373 = sshll.u32 [#allocation13], 4
          %s374 = int_to_ptr.vmem [resolvable:$true] %s373
          %379 = dma.hbm_to_vmem [thread:$0]  %s6, 2048, %s374, [#allocation12], 64, 64, 4
        $region32: #{tpu_custom_call.1} parent=11 // pred_fallthru
          _
        // Predicated region
        $region33: #{tpu_custom_call.1} parent=11 // pred_check
          %p380 = pneg %p251
        $region34: #{tpu_custom_call.1} parent=11 // pred_check_branch
          %382 = sbr.rel (%p380) target = $region36
        $region35: #{tpu_custom_call.1} parent=11 // pred_region
          %s384 = ssub.s32 1024, 1024
          %385 = vsyncadd [#allocation15], %s384
          %s386 = sshll.u32 [#allocation16], 4
          %s387 = int_to_ptr.vmem [resolvable:$true] %s386
          %392 = dma.hbm_to_vmem [thread:$0]  %s8, 1024, %s387, [#allocation15], 128, 128, 8
        $region36: #{tpu_custom_call.1} parent=11 // pred_fallthru
          _
        // Predicated region
        $region37: #{tpu_custom_call.1} parent=11 // pred_check
          %p393 = pneg %p272
        $region38: #{tpu_custom_call.1} parent=11 // pred_check_branch
          %395 = sbr.rel (%p393) target = $region40
        $region39: #{tpu_custom_call.1} parent=11 // pred_region
          %s397 = ssub.s32 1024, 1024
          %398 = vsyncadd [#allocation18], %s397
          %s399 = sshll.u32 [#allocation17], 4
          %s400 = int_to_ptr.vmem [resolvable:$true] %s399
          %405 = dma.hbm_to_vmem [thread:$0]  %s9, 1024, %s400, [#allocation18], 128, 128, 8
        $region40: #{tpu_custom_call.1} parent=11 // pred_fallthru
          _
      $region12: #{tpu_custom_call.1} parent=5 // pred_fallthru
        _
      %p406 = scmp.lt.s32.totalorder %s31, 8
      // Predicated region
      $region41: #{tpu_custom_call.1} parent=5 // pred_check
        %p407 = pneg %p406
      $region42: #{tpu_custom_call.1} parent=5 // pred_check_branch
        %409 = sbr.rel (%p407) target = $region44
      $region43: #{tpu_custom_call.1} parent=5 // pred_region
        // Predicated region
        $region45: #{tpu_custom_call.1} parent=43 // pred_check
          %p410 = pneg %p65
        $region46: #{tpu_custom_call.1} parent=43 // pred_check_branch
          %412 = sbr.rel (%p410) target = $region48
        $region47: #{tpu_custom_call.1} parent=43 // pred_region
          %s413 = sand.u32 %s55, 1
          %s414 = scalar_lea.sflag [#allocation3], %s413
          %s415 = sand.u32 %s55, 1
          %s416 = smul.addr %s415, 16
          %s417 = scalar_lea.vmem [#allocation2], %s416
          %s419 = ssub.s32 256, 256
          %420 = vsyncadd %s414, %s419
          %s421 = smul.addr %s38, 4
          %s422 = sadd.s32 %s39, %s421
          %s423 = smul.addr %s422, 128
          %s424 = scalar_lea.hbm %s0, %s423
          %s425 = sshll.u32 %s417, 4
          %s426 = int_to_ptr.vmem [resolvable:$true] %s425
          %431 = dma.hbm_to_vmem [thread:$0]  %s424, 256, %s426, %s414, 256, 128, 8
        $region48: #{tpu_custom_call.1} parent=43 // pred_fallthru
          _
        // Predicated region
        $region49: #{tpu_custom_call.1} parent=43 // pred_check
          %p432 = pneg %p93
        $region50: #{tpu_custom_call.1} parent=43 // pred_check_branch
          %434 = sbr.rel (%p432) target = $region52
        $region51: #{tpu_custom_call.1} parent=43 // pred_region
          %s435 = sand.u32 %s31, 1
          %s436 = scalar_lea.sflag [#allocation6], %s435
          %s437 = sand.u32 %s83, 1
          %s438 = smul.addr %s437, 16
          %s439 = scalar_lea.vmem [#allocation5], %s438
          %s441 = ssub.s32 256, 256
          %442 = vsyncadd %s436, %s441
          %s443 = smul.addr %s38, 4
          %s444 = sadd.s32 %s39, %s443
          %s445 = smul.addr %s444, 128
          %s446 = scalar_lea.hbm %s1, %s445
          %s447 = sshll.u32 %s439, 4
          %s448 = int_to_ptr.vmem [resolvable:$true] %s447
          %453 = dma.hbm_to_vmem [thread:$0]  %s446, 256, %s448, %s436, 256, 128, 8
        $region52: #{tpu_custom_call.1} parent=43 // pred_fallthru
          _
        // Predicated region
        $region53: #{tpu_custom_call.1} parent=43 // pred_check
          %p454 = pneg %p224
        $region54: #{tpu_custom_call.1} parent=43 // pred_check_branch
          %456 = sbr.rel (%p454) target = $region56
        $region55: #{tpu_custom_call.1} parent=43 // pred_region
          %s457 = sand.u32 %s31, 1
          %s458 = scalar_lea.sflag [#allocation15], %s457
          %s459 = sand.u32 %s214, 1
          %s460 = smul.addr %s459, 256
          %s461 = scalar_lea.vmem [#allocation14], %s460
          %s463 = ssub.s32 4096, 4096
          %464 = vsyncadd %s458, %s463
          %s465 = smul.addr %s38, 32
          %s466 = smul.addr %s465, 128
          %s467 = scalar_lea.hbm %s7, %s466
          %s468 = sshll.u32 %s461, 4
          %s469 = int_to_ptr.vmem [resolvable:$true] %s468
          %474 = dma.hbm_to_vmem [thread:$0]  %s467, 4096, %s469, %s458, 128, 128, 8
        $region56: #{tpu_custom_call.1} parent=43 // pred_fallthru
          _
      $region44: #{tpu_custom_call.1} parent=5 // pred_fallthru
        _
      %p475 = scmp.le.s32.totalorder 1, %s31
      %p476 = scmp.lt.s32.totalorder %s31, 9
      %p477 = pnand %p475, %p476
      %p478 = pneg %p477
      // Predicated region
      $region57: #{tpu_custom_call.1} parent=5 // pred_check
        _
      $region58: #{tpu_custom_call.1} parent=5 // pred_check_branch
        %480 = sbr.rel (%p477) target = $region60
      $region59: #{tpu_custom_call.1} parent=5 // pred_region
        %s481 = ssub.s32 %s31, 1
        %s482 = sand.u32 %s58, 1
        %s483 = scalar_lea.sflag [#allocation3], %s482
        %s484 = sand.u32 %s58, 1
        %s485 = smul.addr %s484, 16
        %s486 = scalar_lea.vmem [#allocation2], %s485
        // Predicated region
        $region61: #{tpu_custom_call.1} parent=59 // pred_check
          %p487 = pneg %p71
        $region62: #{tpu_custom_call.1} parent=59 // pred_check_branch
          %489 = sbr.rel (%p487) target = $region64
        $region63: #{tpu_custom_call.1} parent=59 // pred_region
          %490 = dma.done %s483, 256
        $region64: #{tpu_custom_call.1} parent=59 // pred_fallthru
          _
        %s491 = sand.u32 %s36, 1
        %s492 = scalar_lea.sflag [#allocation6], %s491
        %s493 = sand.u32 %s86, 1
        %s494 = smul.addr %s493, 16
        %s495 = scalar_lea.vmem [#allocation5], %s494
        // Predicated region
        $region65: #{tpu_custom_call.1} parent=59 // pred_check
          %p496 = pneg %p99
        $region66: #{tpu_custom_call.1} parent=59 // pred_check_branch
          %498 = sbr.rel (%p496) target = $region68
        $region67: #{tpu_custom_call.1} parent=59 // pred_region
          %499 = dma.done %s492, 256
        $region68: #{tpu_custom_call.1} parent=59 // pred_fallthru
          _
        // Predicated region
        $region69: #{tpu_custom_call.1} parent=59 // pred_check
          %p500 = pneg %p120
        $region70: #{tpu_custom_call.1} parent=59 // pred_check_branch
          %502 = sbr.rel (%p500) target = $region72
        $region71: #{tpu_custom_call.1} parent=59 // pred_region
          %503 = dma.done [#allocation6], 2048
        $region72: #{tpu_custom_call.1} parent=59 // pred_fallthru
          _
        // Predicated region
        $region73: #{tpu_custom_call.1} parent=59 // pred_check
          %p504 = pneg %p141
        $region74: #{tpu_custom_call.1} parent=59 // pred_check_branch
          %506 = sbr.rel (%p504) target = $region76
        $region75: #{tpu_custom_call.1} parent=59 // pred_region
          %507 = dma.done [#allocation9], 4096
        $region76: #{tpu_custom_call.1} parent=59 // pred_fallthru
          _
        // Predicated region
        $region77: #{tpu_custom_call.1} parent=59 // pred_check
          %p508 = pneg %p162
        $region78: #{tpu_custom_call.1} parent=59 // pred_check_branch
          %510 = sbr.rel (%p508) target = $region80
        $region79: #{tpu_custom_call.1} parent=59 // pred_region
          %511 = dma.done [#allocation9], 1024
        $region80: #{tpu_custom_call.1} parent=59 // pred_fallthru
          _
        // Predicated region
        $region81: #{tpu_custom_call.1} parent=59 // pred_check
          %p512 = pneg %p183
        $region82: #{tpu_custom_call.1} parent=59 // pred_check_branch
          %514 = sbr.rel (%p512) target = $region84
        $region83: #{tpu_custom_call.1} parent=59 // pred_region
          %515 = dma.done [#allocation12], 1024
        $region84: #{tpu_custom_call.1} parent=59 // pred_fallthru
          _
        // Predicated region
        $region85: #{tpu_custom_call.1} parent=59 // pred_check
          %p516 = pneg %p204
        $region86: #{tpu_custom_call.1} parent=59 // pred_check_branch
          %518 = sbr.rel (%p516) target = $region88
        $region87: #{tpu_custom_call.1} parent=59 // pred_region
          %519 = dma.done [#allocation12], 2048
        $region88: #{tpu_custom_call.1} parent=59 // pred_fallthru
          _
        %s520 = sand.u32 %s36, 1
        %s521 = scalar_lea.sflag [#allocation15], %s520
        %s522 = sand.u32 %s217, 1
        %s523 = smul.addr %s522, 256
        %s524 = scalar_lea.vmem [#allocation14], %s523
        // Predicated region
        $region89: #{tpu_custom_call.1} parent=59 // pred_check
          %p525 = pneg %p230
        $region90: #{tpu_custom_call.1} parent=59 // pred_check_branch
          %527 = sbr.rel (%p525) target = $region92
        $region91: #{tpu_custom_call.1} parent=59 // pred_region
          %528 = dma.done %s521, 4096
        $region92: #{tpu_custom_call.1} parent=59 // pred_fallthru
          _
        // Predicated region
        $region93: #{tpu_custom_call.1} parent=59 // pred_check
          %p529 = pneg %p251
        $region94: #{tpu_custom_call.1} parent=59 // pred_check_branch
          %531 = sbr.rel (%p529) target = $region96
        $region95: #{tpu_custom_call.1} parent=59 // pred_region
          %532 = dma.done [#allocation15], 1024
        $region96: #{tpu_custom_call.1} parent=59 // pred_fallthru
          _
        // Predicated region
        $region97: #{tpu_custom_call.1} parent=59 // pred_check
          %p533 = pneg %p272
        $region98: #{tpu_custom_call.1} parent=59 // pred_check_branch
          %535 = sbr.rel (%p533) target = $region100
        $region99: #{tpu_custom_call.1} parent=59 // pred_region
          %536 = dma.done [#allocation18], 1024
        $region100: #{tpu_custom_call.1} parent=59 // pred_fallthru
          _
        %s537 = sand.u32 %s58, 1
        %s538 = scalar_lea.sflag [#allocation3], %s537
        %s539 = sand.u32 %s58, 1
        %s540 = smul.addr %s539, 16
        %s541 = scalar_lea.vmem [#allocation2], %s540
        %p542 = pneg %p71
        %p543 = pneg %p68
        %s544 = sand.u32 %s36, 1
        %s545 = scalar_lea.sflag [#allocation6], %s544
        %s546 = sand.u32 %s86, 1
        %s547 = smul.addr %s546, 16
        %s548 = scalar_lea.vmem [#allocation5], %s547
        %p549 = pneg %p99
        %p550 = pneg %p96
        %p551 = pneg %p120
        %p552 = pneg %p117
        %p553 = pneg %p141
        %p554 = pneg %p138
        %p555 = pneg %p162
        %p556 = pneg %p159
        %p557 = pneg %p183
        %p558 = pneg %p180
        %p559 = pneg %p204
        %p560 = pneg %p201
        %s561 = sand.u32 %s36, 1
        %s562 = scalar_lea.sflag [#allocation15], %s561
        %s563 = sand.u32 %s217, 1
        %s564 = smul.addr %s563, 256
        %s565 = scalar_lea.vmem [#allocation14], %s564
        %p566 = pneg %p230
        %p567 = pneg %p227
        %p568 = pneg %p251
        %p569 = pneg %p248
        %p570 = pneg %p272
        %p571 = pneg %p269
        %p572 = pneg %p300
        %p573 = pneg %p297
        %s574 = sand.u32 %s287, 1
        %s575 = scalar_lea.sflag [#allocation4], %s574
        %s576 = sand.u32 %s287, 1
        %s577 = smul.addr %s576, 64
        %s578 = scalar_lea.vmem [#allocation19], %s577
        %v580 = vld [vmem:[%s486] sm:$0xff]
        %v581 = vld [vmem:[%s486 + $0x8] sm:$0xff]
        %v582 = vpack.c.bf16 %v581, %v580
        %v583 = vld [vmem:[%s495] sm:$0xff]
        %v584 = vld [vmem:[%s495 + $0x8] sm:$0xff]
        %v585 = vpack.c.bf16 %v584, %v583
        %v586 = vld [vmem:[#allocation7] sm:$0xf]
        %v587 = vld [vmem:[#allocation7 + $0x4] sm:$0xf]
        %v588 = vld [vmem:[#allocation7 + $0x8] sm:$0xf]
        %v589 = vld [vmem:[#allocation7 + $0xc] sm:$0xf]
        %v590 = vld [vmem:[#allocation7 + $0x10] sm:$0xf]
        %v591 = vld [vmem:[#allocation7 + $0x14] sm:$0xf]
        %v592 = vld [vmem:[#allocation7 + $0x18] sm:$0xf]
        %v593 = vld [vmem:[#allocation7 + $0x1c] sm:$0xf]
        %v594 = vld [vmem:[#allocation7 + $0x20] sm:$0xf]
        %v595 = vld [vmem:[#allocation7 + $0x24] sm:$0xf]
        %v596 = vld [vmem:[#allocation7 + $0x28] sm:$0xf]
        %v597 = vld [vmem:[#allocation7 + $0x2c] sm:$0xf]
        %v598 = vld [vmem:[#allocation7 + $0x30] sm:$0xf]
        %v599 = vld [vmem:[#allocation7 + $0x34] sm:$0xf]
        %v600 = vld [vmem:[#allocation7 + $0x38] sm:$0xf]
        %v601 = vld [vmem:[#allocation7 + $0x3c] sm:$0xf]
        %v602 = vld [vmem:[#allocation7 + $0x40] sm:$0xf]
        %v603 = vld [vmem:[#allocation7 + $0x44] sm:$0xf]
        %v604 = vld [vmem:[#allocation7 + $0x48] sm:$0xf]
        %v605 = vld [vmem:[#allocation7 + $0x4c] sm:$0xf]
        %v606 = vld [vmem:[#allocation7 + $0x50] sm:$0xf]
        %v607 = vld [vmem:[#allocation7 + $0x54] sm:$0xf]
        %v608 = vld [vmem:[#allocation7 + $0x58] sm:$0xf]
        %v609 = vld [vmem:[#allocation7 + $0x5c] sm:$0xf]
        %v610 = vld [vmem:[#allocation7 + $0x60] sm:$0xf]
        %v611 = vld [vmem:[#allocation7 + $0x64] sm:$0xf]
        %v612 = vld [vmem:[#allocation7 + $0x68] sm:$0xf]
        %v613 = vld [vmem:[#allocation7 + $0x6c] sm:$0xf]
        %v614 = vld [vmem:[#allocation7 + $0x70] sm:$0xf]
        %v615 = vld [vmem:[#allocation7 + $0x74] sm:$0xf]
        %v616 = vld [vmem:[#allocation7 + $0x78] sm:$0xf]
        %v617 = vld [vmem:[#allocation7 + $0x7c] sm:$0xf]
        %v618 = vld [vmem:[#allocation8] sm:$0xff]
        %v619 = vld [vmem:[#allocation8 + $0x8] sm:$0xff]
        %v620 = vld [vmem:[#allocation8 + $0x10] sm:$0xff]
        %v621 = vld [vmem:[#allocation8 + $0x18] sm:$0xff]
        %v622 = vld [vmem:[#allocation8 + $0x20] sm:$0xff]
        %v623 = vld [vmem:[#allocation8 + $0x28] sm:$0xff]
        %v624 = vld [vmem:[#allocation8 + $0x30] sm:$0xff]
        %v625 = vld [vmem:[#allocation8 + $0x38] sm:$0xff]
        %v626 = vld [vmem:[#allocation8 + $0x40] sm:$0xff]
        %v627 = vld [vmem:[#allocation8 + $0x48] sm:$0xff]
        %v628 = vld [vmem:[#allocation8 + $0x50] sm:$0xff]
        %v629 = vld [vmem:[#allocation8 + $0x58] sm:$0xff]
        %v630 = vld [vmem:[#allocation8 + $0x60] sm:$0xff]
        %v631 = vld [vmem:[#allocation8 + $0x68] sm:$0xff]
        %v632 = vld [vmem:[#allocation8 + $0x70] sm:$0xff]
        %v633 = vld [vmem:[#allocation8 + $0x78] sm:$0xff]
        %v634 = vld [vmem:[#allocation8 + $0x80] sm:$0xff]
        %v635 = vld [vmem:[#allocation8 + $0x88] sm:$0xff]
        %v636 = vld [vmem:[#allocation8 + $0x90] sm:$0xff]
        %v637 = vld [vmem:[#allocation8 + $0x98] sm:$0xff]
        %v638 = vld [vmem:[#allocation8 + $0xa0] sm:$0xff]
        %v639 = vld [vmem:[#allocation8 + $0xa8] sm:$0xff]
        %v640 = vld [vmem:[#allocation8 + $0xb0] sm:$0xff]
        %v641 = vld [vmem:[#allocation8 + $0xb8] sm:$0xff]
        %v642 = vld [vmem:[#allocation8 + $0xc0] sm:$0xff]
        %v643 = vld [vmem:[#allocation8 + $0xc8] sm:$0xff]
        %v644 = vld [vmem:[#allocation8 + $0xd0] sm:$0xff]
        %v645 = vld [vmem:[#allocation8 + $0xd8] sm:$0xff]
        %v646 = vld [vmem:[#allocation8 + $0xe0] sm:$0xff]
        %v647 = vld [vmem:[#allocation8 + $0xe8] sm:$0xff]
        %v648 = vld [vmem:[#allocation8 + $0xf0] sm:$0xff]
        %v649 = vld [vmem:[#allocation8 + $0xf8] sm:$0xff]
        %651 = vset.pattern.permute.xlu0 0
        %652 = vperm.xlu0 %651, %v618
        %v653 = vpop.permute.xlu0 %652
        %656 = vset.pattern.permute.xlu0 0
        %657 = vperm.xlu0 %656, %v619
        %v658 = vpop.permute.xlu0 %657
        %661 = vset.pattern.permute.xlu0 0
        %662 = vperm.xlu0 %661, %v620
        %v663 = vpop.permute.xlu0 %662
        %666 = vset.pattern.permute.xlu0 0
        %667 = vperm.xlu0 %666, %v621
        %v668 = vpop.permute.xlu0 %667
        %671 = vset.pattern.permute.xlu0 0
        %672 = vperm.xlu0 %671, %v622
        %v673 = vpop.permute.xlu0 %672
        %676 = vset.pattern.permute.xlu0 0
        %677 = vperm.xlu0 %676, %v623
        %v678 = vpop.permute.xlu0 %677
        %681 = vset.pattern.permute.xlu0 0
        %682 = vperm.xlu0 %681, %v624
        %v683 = vpop.permute.xlu0 %682
        %686 = vset.pattern.permute.xlu0 0
        %687 = vperm.xlu0 %686, %v625
        %v688 = vpop.permute.xlu0 %687
        %691 = vset.pattern.permute.xlu0 0
        %692 = vperm.xlu0 %691, %v626
        %v693 = vpop.permute.xlu0 %692
        %696 = vset.pattern.permute.xlu0 0
        %697 = vperm.xlu0 %696, %v627
        %v698 = vpop.permute.xlu0 %697
        %701 = vset.pattern.permute.xlu0 0
        %702 = vperm.xlu0 %701, %v628
        %v703 = vpop.permute.xlu0 %702
        %706 = vset.pattern.permute.xlu0 0
        %707 = vperm.xlu0 %706, %v629
        %v708 = vpop.permute.xlu0 %707
        %711 = vset.pattern.permute.xlu0 0
        %712 = vperm.xlu0 %711, %v630
        %v713 = vpop.permute.xlu0 %712
        %716 = vset.pattern.permute.xlu0 0
        %717 = vperm.xlu0 %716, %v631
        %v718 = vpop.permute.xlu0 %717
        %721 = vset.pattern.permute.xlu0 0
        %722 = vperm.xlu0 %721, %v632
        %v723 = vpop.permute.xlu0 %722
        %726 = vset.pattern.permute.xlu0 0
        %727 = vperm.xlu0 %726, %v633
        %v728 = vpop.permute.xlu0 %727
        %731 = vset.pattern.permute.xlu0 0
        %732 = vperm.xlu0 %731, %v634
        %v733 = vpop.permute.xlu0 %732
        %736 = vset.pattern.permute.xlu0 0
        %737 = vperm.xlu0 %736, %v635
        %v738 = vpop.permute.xlu0 %737
        %741 = vset.pattern.permute.xlu0 0
        %742 = vperm.xlu0 %741, %v636
        %v743 = vpop.permute.xlu0 %742
        %746 = vset.pattern.permute.xlu0 0
        %747 = vperm.xlu0 %746, %v637
        %v748 = vpop.permute.xlu0 %747
        %751 = vset.pattern.permute.xlu0 0
        %752 = vperm.xlu0 %751, %v638
        %v753 = vpop.permute.xlu0 %752
        %756 = vset.pattern.permute.xlu0 0
        %757 = vperm.xlu0 %756, %v639
        %v758 = vpop.permute.xlu0 %757
        %761 = vset.pattern.permute.xlu0 0
        %762 = vperm.xlu0 %761, %v640
        %v763 = vpop.permute.xlu0 %762
        %766 = vset.pattern.permute.xlu0 0
        %767 = vperm.xlu0 %766, %v641
        %v768 = vpop.permute.xlu0 %767
        %771 = vset.pattern.permute.xlu0 0
        %772 = vperm.xlu0 %771, %v642
        %v773 = vpop.permute.xlu0 %772
        %776 = vset.pattern.permute.xlu0 0
        %777 = vperm.xlu0 %776, %v643
        %v778 = vpop.permute.xlu0 %777
        %781 = vset.pattern.permute.xlu0 0
        %782 = vperm.xlu0 %781, %v644
        %v783 = vpop.permute.xlu0 %782
        %786 = vset.pattern.permute.xlu0 0
        %787 = vperm.xlu0 %786, %v645
        %v788 = vpop.permute.xlu0 %787
        %791 = vset.pattern.permute.xlu0 0
        %792 = vperm.xlu0 %791, %v646
        %v793 = vpop.permute.xlu0 %792
        %796 = vset.pattern.permute.xlu0 0
        %797 = vperm.xlu0 %796, %v647
        %v798 = vpop.permute.xlu0 %797
        %801 = vset.pattern.permute.xlu0 0
        %802 = vperm.xlu0 %801, %v648
        %v803 = vpop.permute.xlu0 %802
        %806 = vset.pattern.permute.xlu0 0
        %807 = vperm.xlu0 %806, %v649
        %v808 = vpop.permute.xlu0 %807
        %v842 = vunpack.c.l.b16 %v586
        %v843 = vunpack.c.l.b16 %v587
        %v844 = vunpack.c.l.b16 %v588
        %v845 = vunpack.c.l.b16 %v589
        %v846 = vunpack.c.l.b16 %v590
        %v847 = vunpack.c.l.b16 %v591
        %v848 = vunpack.c.l.b16 %v592
        %v849 = vunpack.c.l.b16 %v593
        %v850 = vunpack.c.l.b16 %v594
        %v851 = vunpack.c.l.b16 %v595
        %v852 = vunpack.c.l.b16 %v596
        %v853 = vunpack.c.l.b16 %v597
        %v854 = vunpack.c.l.b16 %v598
        %v855 = vunpack.c.l.b16 %v599
        %v856 = vunpack.c.l.b16 %v600
        %v857 = vunpack.c.l.b16 %v601
        %v858 = vunpack.c.l.b16 %v602
        %v859 = vunpack.c.l.b16 %v603
        %v860 = vunpack.c.l.b16 %v604
        %v861 = vunpack.c.l.b16 %v605
        %v862 = vunpack.c.l.b16 %v606
        %v863 = vunpack.c.l.b16 %v607
        %v864 = vunpack.c.l.b16 %v608
        %v865 = vunpack.c.l.b16 %v609
        %v866 = vunpack.c.l.b16 %v610
        %v867 = vunpack.c.l.b16 %v611
        %v868 = vunpack.c.l.b16 %v612
        %v869 = vunpack.c.l.b16 %v613
        %v870 = vunpack.c.l.b16 %v614
        %v871 = vunpack.c.l.b16 %v615
        %v872 = vunpack.c.l.b16 %v616
        %v873 = vunpack.c.l.b16 %v617
        %v874 = vpack.c.b16 %v843, %v842
        %v875 = vpack.c.b16 %v845, %v844
        %v876 = vpack.c.b16 %v847, %v846
        %v877 = vpack.c.b16 %v849, %v848
        %v878 = vpack.c.b16 %v851, %v850
        %v879 = vpack.c.b16 %v853, %v852
        %v880 = vpack.c.b16 %v855, %v854
        %v881 = vpack.c.b16 %v857, %v856
        %v882 = vpack.c.b16 %v859, %v858
        %v883 = vpack.c.b16 %v861, %v860
        %v884 = vpack.c.b16 %v863, %v862
        %v885 = vpack.c.b16 %v865, %v864
        %v886 = vpack.c.b16 %v867, %v866
        %v887 = vpack.c.b16 %v869, %v868
        %v888 = vpack.c.b16 %v871, %v870
        %v889 = vpack.c.b16 %v873, %v872
        %vm890 = vcmask 261120
        %v892 = vsel %vm890, %v874, 0
        %v895 = vsel %vm890, %v875, 0
        %v898 = vsel %vm890, %v876, 0
        %v901 = vsel %vm890, %v877, 0
        %v904 = vsel %vm890, %v878, 0
        %v907 = vsel %vm890, %v879, 0
        %v910 = vsel %vm890, %v880, 0
        %v913 = vsel %vm890, %v881, 0
        %v916 = vsel %vm890, %v882, 0
        %v919 = vsel %vm890, %v883, 0
        %v922 = vsel %vm890, %v884, 0
        %v925 = vsel %vm890, %v885, 0
        %v928 = vsel %vm890, %v886, 0
        %v931 = vsel %vm890, %v887, 0
        %v934 = vsel %vm890, %v888, 0
        %v937 = vsel %vm890, %v889, 0
        %939 = vmatprep.subr.bf16.mxu0 0
        %940 = vmatpush1.bf16.msra.mxu0 %v582
        %941 = vmatprep.subr.bf16.mxu0 0
        %942 = vmatpush1.bf16.msra.mxu0 %v585
        %943 = vmatprep.subr.bf16.mxu0 0
        %944 = vmatpush1.bf16.msra.mxu0 0
        %945 = vmatprep.subr.bf16.mxu0 0
        %946 = vmatpush1.bf16.msra.mxu0 0
        %947 = vmatprep.subr.bf16.mxu0 0
        %948 = vmatpush1.bf16.msra.mxu0 0
        %949 = vmatprep.subr.bf16.mxu0 0
        %950 = vmatpush1.bf16.msra.mxu0 0
        %951 = vmatprep.subr.bf16.mxu0 0
        %952 = vmatpush1.bf16.msra.mxu0 0
        %953 = vmatprep.subr.bf16.mxu0 0
        %954 = vmatpush1.bf16.msra.mxu0 0
        %955 = vmatprep.subr.bf16.mxu0 0
        %956 = vmatpush1.bf16.msra.mxu0 0
        %957 = vmatprep.subr.bf16.mxu0 0
        %958 = vmatpush1.bf16.msra.mxu0 0
        %959 = vmatprep.subr.bf16.mxu0 0
        %960 = vmatpush1.bf16.msra.mxu0 0
        %961 = vmatprep.subr.bf16.mxu0 0
        %962 = vmatpush1.bf16.msra.mxu0 0
        %963 = vmatprep.subr.bf16.mxu0 0
        %964 = vmatpush1.bf16.msra.mxu0 0
        %965 = vmatprep.subr.bf16.mxu0 0
        %966 = vmatpush1.bf16.msra.mxu0 0
        %967 = vmatprep.subr.bf16.mxu0 0
        %968 = vmatpush1.bf16.msra.mxu0 0
        %969 = vmatprep.subr.bf16.mxu0 0
        %970 = vmatpush1.bf16.msra.mxu0 0
        %971 = vmatprep.mubr.bf16.mxu0 0
        %972 = vmatmul.mubr.bf16.gmra.mrb[0].mxu0 %v892
        %v973 = vpop.f32.mrb[0].mxu0
        %v974 = vadd.f32 %v653, %v973
        %v975 = vpop.f32.mrb[0].mxu0
        %v976 = vpop.f32.mrb[0].mxu0
        %v977 = vadd.f32 %v658, %v976
        %v978 = vpop.f32.mrb[0].mxu0
        %979 = vmatprep.mubr.bf16.mxu0 0
        %980 = vmatmul.mubr.bf16.gmra.mrb[0].mxu0 %v895
        %v981 = vpop.f32.mrb[0].mxu0
        %v982 = vadd.f32 %v663, %v981
        %v983 = vpop.f32.mrb[0].mxu0
        %v984 = vpop.f32.mrb[0].mxu0
        %v985 = vadd.f32 %v668, %v984
        %v986 = vpop.f32.mrb[0].mxu0
        %987 = vmatprep.mubr.bf16.mxu0 0
        %988 = vmatmul.mubr.bf16.gmra.mrb[0].mxu0 %v898
        %v989 = vpop.f32.mrb[0].mxu0
        %v990 = vadd.f32 %v673, %v989
        %v991 = vpop.f32.mrb[0].mxu0
        %v992 = vpop.f32.mrb[0].mxu0
        %v993 = vadd.f32 %v678, %v992
        %v994 = vpop.f32.mrb[0].mxu0
        %995 = vmatprep.mubr.bf16.mxu0 0
        %996 = vmatmul.mubr.bf16.gmra.mrb[0].mxu0 %v901
        %v997 = vpop.f32.mrb[0].mxu0
        %v998 = vadd.f32 %v683, %v997
        %v999 = vpop.f32.mrb[0].mxu0
        %v1000 = vpop.f32.mrb[0].mxu0
        %v1001 = vadd.f32 %v688, %v1000
        %v1002 = vpop.f32.mrb[0].mxu0
        %1003 = vmatprep.mubr.bf16.mxu0 0
        %1004 = vmatmul.mubr.bf16.gmra.mrb[0].mxu0 %v904
        %v1005 = vpop.f32.mrb[0].mxu0
        %v1006 = vadd.f32 %v693, %v1005
        %v1007 = vpop.f32.mrb[0].mxu0
        %v1008 = vpop.f32.mrb[0].mxu0
        %v1009 = vadd.f32 %v698, %v1008
        %v1010 = vpop.f32.mrb[0].mxu0
        %1011 = vmatprep.mubr.bf16.mxu0 0
        %1012 = vmatmul.mubr.bf16.gmra.mrb[0].mxu0 %v907
        %v1013 = vpop.f32.mrb[0].mxu0
        %v1014 = vadd.f32 %v703, %v1013
        %v1015 = vpop.f32.mrb[0].mxu0
        %v1016 = vpop.f32.mrb[0].mxu0
        %v1017 = vadd.f32 %v708, %v1016
        %v1018 = vpop.f32.mrb[0].mxu0
        %1019 = vmatprep.mubr.bf16.mxu0 0
        %1020 = vmatmul.mubr.bf16.gmra.mrb[0].mxu0 %v910
        %v1021 = vpop.f32.mrb[0].mxu0
        %v1022 = vadd.f32 %v713, %v1021
        %v1023 = vpop.f32.mrb[0].mxu0
        %v1024 = vpop.f32.mrb[0].mxu0
        %v1025 = vadd.f32 %v718, %v1024
        %v1026 = vpop.f32.mrb[0].mxu0
        %1027 = vmatprep.mubr.bf16.mxu0 0
        %1028 = vmatmul.mubr.bf16.gmra.mrb[0].mxu0 %v913
        %v1029 = vpop.f32.mrb[0].mxu0
        %v1030 = vadd.f32 %v723, %v1029
        %v1031 = vpop.f32.mrb[0].mxu0
        %v1032 = vpop.f32.mrb[0].mxu0
        %v1033 = vadd.f32 %v728, %v1032
        %v1034 = vpop.f32.mrb[0].mxu0
        %1035 = vmatprep.mubr.bf16.mxu0 0
        %1036 = vmatmul.mubr.bf16.gmra.mrb[0].mxu0 %v916
        %v1037 = vpop.f32.mrb[0].mxu0
        %v1038 = vadd.f32 %v733, %v1037
        %v1039 = vpop.f32.mrb[0].mxu0
        %v1040 = vpop.f32.mrb[0].mxu0
        %v1041 = vadd.f32 %v738, %v1040
        %v1042 = vpop.f32.mrb[0].mxu0
        %1043 = vmatprep.mubr.bf16.mxu0 0
        %1044 = vmatmul.mubr.bf16.gmra.mrb[0].mxu0 %v919
        %v1045 = vpop.f32.mrb[0].mxu0
        %v1046 = vadd.f32 %v743, %v1045
        %v1047 = vpop.f32.mrb[0].mxu0
        %v1048 = vpop.f32.mrb[0].mxu0
        %v1049 = vadd.f32 %v748, %v1048
        %v1050 = vpop.f32.mrb[0].mxu0
        %1051 = vmatprep.mubr.bf16.mxu0 0
        %1052 = vmatmul.mubr.bf16.gmra.mrb[0].mxu0 %v922
        %v1053 = vpop.f32.mrb[0].mxu0
        %v1054 = vadd.f32 %v753, %v1053
        %v1055 = vpop.f32.mrb[0].mxu0
        %v1056 = vpop.f32.mrb[0].mxu0
        %v1057 = vadd.f32 %v758, %v1056
        %v1058 = vpop.f32.mrb[0].mxu0
        %1059 = vmatprep.mubr.bf16.mxu0 0
        %1060 = vmatmul.mubr.bf16.gmra.mrb[0].mxu0 %v925
        %v1061 = vpop.f32.mrb[0].mxu0
        %v1062 = vadd.f32 %v763, %v1061
        %v1063 = vpop.f32.mrb[0].mxu0
        %v1064 = vpop.f32.mrb[0].mxu0
        %v1065 = vadd.f32 %v768, %v1064
        %v1066 = vpop.f32.mrb[0].mxu0
        %1067 = vmatprep.mubr.bf16.mxu0 0
        %1068 = vmatmul.mubr.bf16.gmra.mrb[0].mxu0 %v928
        %v1069 = vpop.f32.mrb[0].mxu0
        %v1070 = vadd.f32 %v773, %v1069
        %v1071 = vpop.f32.mrb[0].mxu0
        %v1072 = vpop.f32.mrb[0].mxu0
        %v1073 = vadd.f32 %v778, %v1072
        %v1074 = vpop.f32.mrb[0].mxu0
        %1075 = vmatprep.mubr.bf16.mxu0 0
        %1076 = vmatmul.mubr.bf16.gmra.mrb[0].mxu0 %v931
        %v1077 = vpop.f32.mrb[0].mxu0
        %v1078 = vadd.f32 %v783, %v1077
        %v1079 = vpop.f32.mrb[0].mxu0
        %v1080 = vpop.f32.mrb[0].mxu0
        %v1081 = vadd.f32 %v788, %v1080
        %v1082 = vpop.f32.mrb[0].mxu0
        %1083 = vmatprep.mubr.bf16.mxu0 0
        %1084 = vmatmul.mubr.bf16.gmra.mrb[0].mxu0 %v934
        %v1085 = vpop.f32.mrb[0].mxu0
        %v1086 = vadd.f32 %v793, %v1085
        %v1087 = vpop.f32.mrb[0].mxu0
        %v1088 = vpop.f32.mrb[0].mxu0
        %v1089 = vadd.f32 %v798, %v1088
        %v1090 = vpop.f32.mrb[0].mxu0
        %1091 = vmatprep.mubr.bf16.mxu0 0
        %1092 = vmatmul.mubr.bf16.gmra.mrb[0].mxu0 %v937
        %v1093 = vpop.f32.mrb[0].mxu0
        %v1094 = vadd.f32 %v803, %v1093
        %v1095 = vpop.f32.mrb[0].mxu0
        %v1096 = vpop.f32.mrb[0].mxu0
        %v1097 = vadd.f32 %v808, %v1096
        %v1098 = vpop.f32.mrb[0].mxu0
        %1099 = vdwg.mxu0
        %v1100 = vmax.f32 %v974, 0.0
        %v1101 = vmax.f32 %v977, 0.0
        %v1102 = vmax.f32 %v982, 0.0
        %v1103 = vmax.f32 %v985, 0.0
        %v1104 = vmax.f32 %v990, 0.0
        %v1105 = vmax.f32 %v993, 0.0
        %v1106 = vmax.f32 %v998, 0.0
        %v1107 = vmax.f32 %v1001, 0.0
        %v1108 = vmax.f32 %v1006, 0.0
        %v1109 = vmax.f32 %v1009, 0.0
        %v1110 = vmax.f32 %v1014, 0.0
        %v1111 = vmax.f32 %v1017, 0.0
        %v1112 = vmax.f32 %v1022, 0.0
        %v1113 = vmax.f32 %v1025, 0.0
        %v1114 = vmax.f32 %v1030, 0.0
        %v1115 = vmax.f32 %v1033, 0.0
        %v1116 = vmax.f32 %v1038, 0.0
        %v1117 = vmax.f32 %v1041, 0.0
        %v1118 = vmax.f32 %v1046, 0.0
        %v1119 = vmax.f32 %v1049, 0.0
        %v1120 = vmax.f32 %v1054, 0.0
        %v1121 = vmax.f32 %v1057, 0.0
        %v1122 = vmax.f32 %v1062, 0.0
        %v1123 = vmax.f32 %v1065, 0.0
        %v1124 = vmax.f32 %v1070, 0.0
        %v1125 = vmax.f32 %v1073, 0.0
        %v1126 = vmax.f32 %v1078, 0.0
        %v1127 = vmax.f32 %v1081, 0.0
        %v1128 = vmax.f32 %v1086, 0.0
        %v1129 = vmax.f32 %v1089, 0.0
        %v1130 = vmax.f32 %v1094, 0.0
        %v1131 = vmax.f32 %v1097, 0.0
        %v1132 = vpack.c.bf16 %v1101, %v1100
        %v1133 = vpack.c.bf16 %v1103, %v1102
        %v1134 = vpack.c.bf16 %v1105, %v1104
        %v1135 = vpack.c.bf16 %v1107, %v1106
        %v1136 = vpack.c.bf16 %v1109, %v1108
        %v1137 = vpack.c.bf16 %v1111, %v1110
        %v1138 = vpack.c.bf16 %v1113, %v1112
        %v1139 = vpack.c.bf16 %v1115, %v1114
        %v1140 = vpack.c.bf16 %v1117, %v1116
        %v1141 = vpack.c.bf16 %v1119, %v1118
        %v1142 = vpack.c.bf16 %v1121, %v1120
        %v1143 = vpack.c.bf16 %v1123, %v1122
        %v1144 = vpack.c.bf16 %v1125, %v1124
        %v1145 = vpack.c.bf16 %v1127, %v1126
        %v1146 = vpack.c.bf16 %v1129, %v1128
        %v1147 = vpack.c.bf16 %v1131, %v1130
        %v1148 = vld [vmem:[#allocation10] sm:$0xff]
        %v1149 = vld [vmem:[#allocation10 + $0x8] sm:$0xff]
        %v1150 = vld [vmem:[#allocation10 + $0x10] sm:$0xff]
        %v1151 = vld [vmem:[#allocation10 + $0x18] sm:$0xff]
        %v1152 = vld [vmem:[#allocation10 + $0x20] sm:$0xff]
        %v1153 = vld [vmem:[#allocation10 + $0x28] sm:$0xff]
        %v1154 = vld [vmem:[#allocation10 + $0x30] sm:$0xff]
        %v1155 = vld [vmem:[#allocation10 + $0x38] sm:$0xff]
        %v1156 = vld [vmem:[#allocation11] sm:$0xff]
        %v1157 = vld [vmem:[#allocation11 + $0x8] sm:$0xff]
        %v1158 = vld [vmem:[#allocation11 + $0x10] sm:$0xff]
        %v1159 = vld [vmem:[#allocation11 + $0x18] sm:$0xff]
        %v1160 = vld [vmem:[#allocation11 + $0x20] sm:$0xff]
        %v1161 = vld [vmem:[#allocation11 + $0x28] sm:$0xff]
        %v1162 = vld [vmem:[#allocation11 + $0x30] sm:$0xff]
        %v1163 = vld [vmem:[#allocation11 + $0x38] sm:$0xff]
        %1165 = vset.pattern.permute.xlu0 0
        %1166 = vperm.xlu0 %1165, %v1156
        %v1167 = vpop.permute.xlu0 %1166
        %1170 = vset.pattern.permute.xlu0 0
        %1171 = vperm.xlu0 %1170, %v1157
        %v1172 = vpop.permute.xlu0 %1171
        %1175 = vset.pattern.permute.xlu0 0
        %1176 = vperm.xlu0 %1175, %v1158
        %v1177 = vpop.permute.xlu0 %1176
        %1180 = vset.pattern.permute.xlu0 0
        %1181 = vperm.xlu0 %1180, %v1159
        %v1182 = vpop.permute.xlu0 %1181
        %1185 = vset.pattern.permute.xlu0 0
        %1186 = vperm.xlu0 %1185, %v1160
        %v1187 = vpop.permute.xlu0 %1186
        %1190 = vset.pattern.permute.xlu0 0
        %1191 = vperm.xlu0 %1190, %v1161
        %v1192 = vpop.permute.xlu0 %1191
        %1195 = vset.pattern.permute.xlu0 0
        %1196 = vperm.xlu0 %1195, %v1162
        %v1197 = vpop.permute.xlu0 %1196
        %1200 = vset.pattern.permute.xlu0 0
        %1201 = vperm.xlu0 %1200, %v1163
        %v1202 = vpop.permute.xlu0 %1201
        %v1212 = vunpack.c.l.b16 %v1148
        %v1213 = vunpack.c.h.b16 %v1148
        %v1214 = vunpack.c.l.b16 %v1149
        %v1215 = vunpack.c.h.b16 %v1149
        %v1216 = vunpack.c.l.b16 %v1150
        %v1217 = vunpack.c.h.b16 %v1150
        %v1218 = vunpack.c.l.b16 %v1151
        %v1219 = vunpack.c.h.b16 %v1151
        %v1220 = vunpack.c.l.b16 %v1152
        %v1221 = vunpack.c.h.b16 %v1152
        %v1222 = vunpack.c.l.b16 %v1153
        %v1223 = vunpack.c.h.b16 %v1153
        %v1224 = vunpack.c.l.b16 %v1154
        %v1225 = vunpack.c.h.b16 %v1154
        %v1226 = vunpack.c.l.b16 %v1155
        %v1227 = vunpack.c.h.b16 %v1155
        %v1228 = vpack.c.b16 %v1214, %v1212
        %v1229 = vpack.c.b16 %v1215, %v1213
        %v1230 = vpack.c.b16 %v1218, %v1216
        %v1231 = vpack.c.b16 %v1219, %v1217
        %v1232 = vpack.c.b16 %v1222, %v1220
        %v1233 = vpack.c.b16 %v1223, %v1221
        %v1234 = vpack.c.b16 %v1226, %v1224
        %v1235 = vpack.c.b16 %v1227, %v1225
        %1244 = vmatprep.subr.bf16.mxu0 0
        %1245 = vmatpush1.bf16.msra.mxu0 %v1132
        %1246 = vmatprep.subr.bf16.mxu0 0
        %1247 = vmatpush1.bf16.msra.mxu0 %v1133
        %1248 = vmatprep.subr.bf16.mxu0 0
        %1249 = vmatpush1.bf16.msra.mxu0 %v1134
        %1250 = vmatprep.subr.bf16.mxu0 0
        %1251 = vmatpush1.bf16.msra.mxu0 %v1135
        %1252 = vmatprep.subr.bf16.mxu0 0
        %1253 = vmatpush1.bf16.msra.mxu0 %v1136
        %1254 = vmatprep.subr.bf16.mxu0 0
        %1255 = vmatpush1.bf16.msra.mxu0 %v1137
        %1256 = vmatprep.subr.bf16.mxu0 0
        %1257 = vmatpush1.bf16.msra.mxu0 %v1138
        %1258 = vmatprep.subr.bf16.mxu0 0
        %1259 = vmatpush1.bf16.msra.mxu0 %v1139
        %1260 = vmatprep.subr.bf16.mxu0 0
        %1261 = vmatpush1.bf16.msra.mxu0 %v1140
        %1262 = vmatprep.subr.bf16.mxu0 0
        %1263 = vmatpush1.bf16.msra.mxu0 %v1141
        %1264 = vmatprep.subr.bf16.mxu0 0
        %1265 = vmatpush1.bf16.msra.mxu0 %v1142
        %1266 = vmatprep.subr.bf16.mxu0 0
        %1267 = vmatpush1.bf16.msra.mxu0 %v1143
        %1268 = vmatprep.subr.bf16.mxu0 0
        %1269 = vmatpush1.bf16.msra.mxu0 %v1144
        %1270 = vmatprep.subr.bf16.mxu0 0
        %1271 = vmatpush1.bf16.msra.mxu0 %v1145
        %1272 = vmatprep.subr.bf16.mxu0 0
        %1273 = vmatpush1.bf16.msra.mxu0 %v1146
        %1274 = vmatprep.subr.bf16.mxu0 0
        %1275 = vmatpush1.bf16.msra.mxu0 %v1147
        %1276 = vmatprep.mubr.bf16.mxu0 %v1229
        %1277 = vmatmul.mubr.bf16.gmra.mrb[0].mxu0 %v1228
        %v1278 = vpop.f32.mrb[0].mxu0
        %v1279 = vadd.f32 %v1167, %v1278
        %v1280 = vpop.f32.mrb[0].mxu0
        %v1281 = vpop.f32.mrb[0].mxu0
        %v1282 = vadd.f32 %v1172, %v1281
        %v1283 = vpop.f32.mrb[0].mxu0
        %1284 = vmatprep.mubr.bf16.mxu0 %v1231
        %1285 = vmatmul.mubr.bf16.gmra.mrb[0].mxu0 %v1230
        %v1286 = vpop.f32.mrb[0].mxu0
        %v1287 = vadd.f32 %v1177, %v1286
        %v1288 = vpop.f32.mrb[0].mxu0
        %v1289 = vpop.f32.mrb[0].mxu0
        %v1290 = vadd.f32 %v1182, %v1289
        %v1291 = vpop.f32.mrb[0].mxu0
        %1292 = vmatprep.mubr.bf16.mxu0 %v1233
        %1293 = vmatmul.mubr.bf16.gmra.mrb[0].mxu0 %v1232
        %v1294 = vpop.f32.mrb[0].mxu0
        %v1295 = vadd.f32 %v1187, %v1294
        %v1296 = vpop.f32.mrb[0].mxu0
        %v1297 = vpop.f32.mrb[0].mxu0
        %v1298 = vadd.f32 %v1192, %v1297
        %v1299 = vpop.f32.mrb[0].mxu0
        %1300 = vmatprep.mubr.bf16.mxu0 %v1235
        %1301 = vmatmul.mubr.bf16.gmra.mrb[0].mxu0 %v1234
        %v1302 = vpop.f32.mrb[0].mxu0
        %v1303 = vadd.f32 %v1197, %v1302
        %v1304 = vpop.f32.mrb[0].mxu0
        %v1305 = vpop.f32.mrb[0].mxu0
        %v1306 = vadd.f32 %v1202, %v1305
        %v1307 = vpop.f32.mrb[0].mxu0
        %1308 = vdwg.mxu0
        %v1309 = vmax.f32 %v1279, 0.0
        %v1310 = vmax.f32 %v1282, 0.0
        %v1311 = vmax.f32 %v1287, 0.0
        %v1312 = vmax.f32 %v1290, 0.0
        %v1313 = vmax.f32 %v1295, 0.0
        %v1314 = vmax.f32 %v1298, 0.0
        %v1315 = vmax.f32 %v1303, 0.0
        %v1316 = vmax.f32 %v1306, 0.0
        %v1317 = vpack.c.bf16 %v1310, %v1309
        %v1318 = vpack.c.bf16 %v1312, %v1311
        %v1319 = vpack.c.bf16 %v1314, %v1313
        %v1320 = vpack.c.bf16 %v1316, %v1315
        %v1321 = vld [vmem:[#allocation13] sm:$0xf]
        %v1322 = vld [vmem:[#allocation13 + $0x4] sm:$0xf]
        %v1323 = vld [vmem:[#allocation13 + $0x8] sm:$0xf]
        %v1324 = vld [vmem:[#allocation13 + $0xc] sm:$0xf]
        %v1325 = vld [vmem:[#allocation13 + $0x10] sm:$0xf]
        %v1326 = vld [vmem:[#allocation13 + $0x14] sm:$0xf]
        %v1327 = vld [vmem:[#allocation13 + $0x18] sm:$0xf]
        %v1328 = vld [vmem:[#allocation13 + $0x1c] sm:$0xf]
        %v1329 = vld [vmem:[#allocation13 + $0x20] sm:$0xf]
        %v1330 = vld [vmem:[#allocation13 + $0x24] sm:$0xf]
        %v1331 = vld [vmem:[#allocation13 + $0x28] sm:$0xf]
        %v1332 = vld [vmem:[#allocation13 + $0x2c] sm:$0xf]
        %v1333 = vld [vmem:[#allocation13 + $0x30] sm:$0xf]
        %v1334 = vld [vmem:[#allocation13 + $0x34] sm:$0xf]
        %v1335 = vld [vmem:[#allocation13 + $0x38] sm:$0xf]
        %v1336 = vld [vmem:[#allocation13 + $0x3c] sm:$0xf]
        %v1337 = vld [vmem:[#allocation13 + $0x40] sm:$0xf]
        %v1338 = vld [vmem:[#allocation13 + $0x44] sm:$0xf]
        %v1339 = vld [vmem:[#allocation13 + $0x48] sm:$0xf]
        %v1340 = vld [vmem:[#allocation13 + $0x4c] sm:$0xf]
        %v1341 = vld [vmem:[#allocation13 + $0x50] sm:$0xf]
        %v1342 = vld [vmem:[#allocation13 + $0x54] sm:$0xf]
        %v1343 = vld [vmem:[#allocation13 + $0x58] sm:$0xf]
        %v1344 = vld [vmem:[#allocation13 + $0x5c] sm:$0xf]
        %v1345 = vld [vmem:[#allocation13 + $0x60] sm:$0xf]
        %v1346 = vld [vmem:[#allocation13 + $0x64] sm:$0xf]
        %v1347 = vld [vmem:[#allocation13 + $0x68] sm:$0xf]
        %v1348 = vld [vmem:[#allocation13 + $0x6c] sm:$0xf]
        %v1349 = vld [vmem:[#allocation13 + $0x70] sm:$0xf]
        %v1350 = vld [vmem:[#allocation13 + $0x74] sm:$0xf]
        %v1351 = vld [vmem:[#allocation13 + $0x78] sm:$0xf]
        %v1352 = vld [vmem:[#allocation13 + $0x7c] sm:$0xf]
        %v1353 = vld [vmem:[%s524] sm:$0xff]
        %v1354 = vld [vmem:[%s524 + $0x8] sm:$0xff]
        %v1355 = vld [vmem:[%s524 + $0x10] sm:$0xff]
        %v1356 = vld [vmem:[%s524 + $0x18] sm:$0xff]
        %v1357 = vld [vmem:[%s524 + $0x20] sm:$0xff]
        %v1358 = vld [vmem:[%s524 + $0x28] sm:$0xff]
        %v1359 = vld [vmem:[%s524 + $0x30] sm:$0xff]
        %v1360 = vld [vmem:[%s524 + $0x38] sm:$0xff]
        %v1361 = vld [vmem:[%s524 + $0x40] sm:$0xff]
        %v1362 = vld [vmem:[%s524 + $0x48] sm:$0xff]
        %v1363 = vld [vmem:[%s524 + $0x50] sm:$0xff]
        %v1364 = vld [vmem:[%s524 + $0x58] sm:$0xff]
        %v1365 = vld [vmem:[%s524 + $0x60] sm:$0xff]
        %v1366 = vld [vmem:[%s524 + $0x68] sm:$0xff]
        %v1367 = vld [vmem:[%s524 + $0x70] sm:$0xff]
        %v1368 = vld [vmem:[%s524 + $0x78] sm:$0xff]
        %v1369 = vld [vmem:[%s524 + $0x80] sm:$0xff]
        %v1370 = vld [vmem:[%s524 + $0x88] sm:$0xff]
        %v1371 = vld [vmem:[%s524 + $0x90] sm:$0xff]
        %v1372 = vld [vmem:[%s524 + $0x98] sm:$0xff]
        %v1373 = vld [vmem:[%s524 + $0xa0] sm:$0xff]
        %v1374 = vld [vmem:[%s524 + $0xa8] sm:$0xff]
        %v1375 = vld [vmem:[%s524 + $0xb0] sm:$0xff]
        %v1376 = vld [vmem:[%s524 + $0xb8] sm:$0xff]
        %v1377 = vld [vmem:[%s524 + $0xc0] sm:$0xff]
        %v1378 = vld [vmem:[%s524 + $0xc8] sm:$0xff]
        %v1379 = vld [vmem:[%s524 + $0xd0] sm:$0xff]
        %v1380 = vld [vmem:[%s524 + $0xd8] sm:$0xff]
        %v1381 = vld [vmem:[%s524 + $0xe0] sm:$0xff]
        %v1382 = vld [vmem:[%s524 + $0xe8] sm:$0xff]
        %v1383 = vld [vmem:[%s524 + $0xf0] sm:$0xff]
        %v1384 = vld [vmem:[%s524 + $0xf8] sm:$0xff]
        %1386 = vset.pattern.permute.xlu0 0
        %1387 = vperm.xlu0 %1386, %v1353
        %v1388 = vpop.permute.xlu0 %1387
        %1391 = vset.pattern.permute.xlu0 0
        %1392 = vperm.xlu0 %1391, %v1354
        %v1393 = vpop.permute.xlu0 %1392
        %1396 = vset.pattern.permute.xlu0 0
        %1397 = vperm.xlu0 %1396, %v1355
        %v1398 = vpop.permute.xlu0 %1397
        %1401 = vset.pattern.permute.xlu0 0
        %1402 = vperm.xlu0 %1401, %v1356
        %v1403 = vpop.permute.xlu0 %1402
        %1406 = vset.pattern.permute.xlu0 0
        %1407 = vperm.xlu0 %1406, %v1357
        %v1408 = vpop.permute.xlu0 %1407
        %1411 = vset.pattern.permute.xlu0 0
        %1412 = vperm.xlu0 %1411, %v1358
        %v1413 = vpop.permute.xlu0 %1412
        %1416 = vset.pattern.permute.xlu0 0
        %1417 = vperm.xlu0 %1416, %v1359
        %v1418 = vpop.permute.xlu0 %1417
        %1421 = vset.pattern.permute.xlu0 0
        %1422 = vperm.xlu0 %1421, %v1360
        %v1423 = vpop.permute.xlu0 %1422
        %1426 = vset.pattern.permute.xlu0 0
        %1427 = vperm.xlu0 %1426, %v1361
        %v1428 = vpop.permute.xlu0 %1427
        %1431 = vset.pattern.permute.xlu0 0
        %1432 = vperm.xlu0 %1431, %v1362
        %v1433 = vpop.permute.xlu0 %1432
        %1436 = vset.pattern.permute.xlu0 0
        %1437 = vperm.xlu0 %1436, %v1363
        %v1438 = vpop.permute.xlu0 %1437
        %1441 = vset.pattern.permute.xlu0 0
        %1442 = vperm.xlu0 %1441, %v1364
        %v1443 = vpop.permute.xlu0 %1442
        %1446 = vset.pattern.permute.xlu0 0
        %1447 = vperm.xlu0 %1446, %v1365
        %v1448 = vpop.permute.xlu0 %1447
        %1451 = vset.pattern.permute.xlu0 0
        %1452 = vperm.xlu0 %1451, %v1366
        %v1453 = vpop.permute.xlu0 %1452
        %1456 = vset.pattern.permute.xlu0 0
        %1457 = vperm.xlu0 %1456, %v1367
        %v1458 = vpop.permute.xlu0 %1457
        %1461 = vset.pattern.permute.xlu0 0
        %1462 = vperm.xlu0 %1461, %v1368
        %v1463 = vpop.permute.xlu0 %1462
        %1466 = vset.pattern.permute.xlu0 0
        %1467 = vperm.xlu0 %1466, %v1369
        %v1468 = vpop.permute.xlu0 %1467
        %1471 = vset.pattern.permute.xlu0 0
        %1472 = vperm.xlu0 %1471, %v1370
        %v1473 = vpop.permute.xlu0 %1472
        %1476 = vset.pattern.permute.xlu0 0
        %1477 = vperm.xlu0 %1476, %v1371
        %v1478 = vpop.permute.xlu0 %1477
        %1481 = vset.pattern.permute.xlu0 0
        %1482 = vperm.xlu0 %1481, %v1372
        %v1483 = vpop.permute.xlu0 %1482
        %1486 = vset.pattern.permute.xlu0 0
        %1487 = vperm.xlu0 %1486, %v1373
        %v1488 = vpop.permute.xlu0 %1487
        %1491 = vset.pattern.permute.xlu0 0
        %1492 = vperm.xlu0 %1491, %v1374
        %v1493 = vpop.permute.xlu0 %1492
        %1496 = vset.pattern.permute.xlu0 0
        %1497 = vperm.xlu0 %1496, %v1375
        %v1498 = vpop.permute.xlu0 %1497
        %1501 = vset.pattern.permute.xlu0 0
        %1502 = vperm.xlu0 %1501, %v1376
        %v1503 = vpop.permute.xlu0 %1502
        %1506 = vset.pattern.permute.xlu0 0
        %1507 = vperm.xlu0 %1506, %v1377
        %v1508 = vpop.permute.xlu0 %1507
        %1511 = vset.pattern.permute.xlu0 0
        %1512 = vperm.xlu0 %1511, %v1378
        %v1513 = vpop.permute.xlu0 %1512
        %1516 = vset.pattern.permute.xlu0 0
        %1517 = vperm.xlu0 %1516, %v1379
        %v1518 = vpop.permute.xlu0 %1517
        %1521 = vset.pattern.permute.xlu0 0
        %1522 = vperm.xlu0 %1521, %v1380
        %v1523 = vpop.permute.xlu0 %1522
        %1526 = vset.pattern.permute.xlu0 0
        %1527 = vperm.xlu0 %1526, %v1381
        %v1528 = vpop.permute.xlu0 %1527
        %1531 = vset.pattern.permute.xlu0 0
        %1532 = vperm.xlu0 %1531, %v1382
        %v1533 = vpop.permute.xlu0 %1532
        %1536 = vset.pattern.permute.xlu0 0
        %1537 = vperm.xlu0 %1536, %v1383
        %v1538 = vpop.permute.xlu0 %1537
        %1541 = vset.pattern.permute.xlu0 0
        %1542 = vperm.xlu0 %1541, %v1384
        %v1543 = vpop.permute.xlu0 %1542
        %v1577 = vunpack.c.l.b16 %v1321
        %v1578 = vunpack.c.l.b16 %v1322
        %v1579 = vunpack.c.l.b16 %v1323
        %v1580 = vunpack.c.l.b16 %v1324
        %v1581 = vunpack.c.l.b16 %v1325
        %v1582 = vunpack.c.l.b16 %v1326
        %v1583 = vunpack.c.l.b16 %v1327
        %v1584 = vunpack.c.l.b16 %v1328
        %v1585 = vunpack.c.l.b16 %v1329
        %v1586 = vunpack.c.l.b16 %v1330
        %v1587 = vunpack.c.l.b16 %v1331
        %v1588 = vunpack.c.l.b16 %v1332
        %v1589 = vunpack.c.l.b16 %v1333
        %v1590 = vunpack.c.l.b16 %v1334
        %v1591 = vunpack.c.l.b16 %v1335
        %v1592 = vunpack.c.l.b16 %v1336
        %v1593 = vunpack.c.l.b16 %v1337
        %v1594 = vunpack.c.l.b16 %v1338
        %v1595 = vunpack.c.l.b16 %v1339
        %v1596 = vunpack.c.l.b16 %v1340
        %v1597 = vunpack.c.l.b16 %v1341
        %v1598 = vunpack.c.l.b16 %v1342
        %v1599 = vunpack.c.l.b16 %v1343
        %v1600 = vunpack.c.l.b16 %v1344
        %v1601 = vunpack.c.l.b16 %v1345
        %v1602 = vunpack.c.l.b16 %v1346
        %v1603 = vunpack.c.l.b16 %v1347
        %v1604 = vunpack.c.l.b16 %v1348
        %v1605 = vunpack.c.l.b16 %v1349
        %v1606 = vunpack.c.l.b16 %v1350
        %v1607 = vunpack.c.l.b16 %v1351
        %v1608 = vunpack.c.l.b16 %v1352
        %v1609 = vpack.c.b16 %v1578, %v1577
        %v1610 = vpack.c.b16 %v1580, %v1579
        %v1611 = vpack.c.b16 %v1582, %v1581
        %v1612 = vpack.c.b16 %v1584, %v1583
        %v1613 = vpack.c.b16 %v1586, %v1585
        %v1614 = vpack.c.b16 %v1588, %v1587
        %v1615 = vpack.c.b16 %v1590, %v1589
        %v1616 = vpack.c.b16 %v1592, %v1591
        %v1617 = vpack.c.b16 %v1594, %v1593
        %v1618 = vpack.c.b16 %v1596, %v1595
        %v1619 = vpack.c.b16 %v1598, %v1597
        %v1620 = vpack.c.b16 %v1600, %v1599
        %v1621 = vpack.c.b16 %v1602, %v1601
        %v1622 = vpack.c.b16 %v1604, %v1603
        %v1623 = vpack.c.b16 %v1606, %v1605
        %v1624 = vpack.c.b16 %v1608, %v1607
        %vm1625 = vcmask 523264
        %v1627 = vsel %vm1625, %v1609, 0
        %v1630 = vsel %vm1625, %v1610, 0
        %v1633 = vsel %vm1625, %v1611, 0
        %v1636 = vsel %vm1625, %v1612, 0
        %v1639 = vsel %vm1625, %v1613, 0
        %v1642 = vsel %vm1625, %v1614, 0
        %v1645 = vsel %vm1625, %v1615, 0
        %v1648 = vsel %vm1625, %v1616, 0
        %v1651 = vsel %vm1625, %v1617, 0
        %v1654 = vsel %vm1625, %v1618, 0
        %v1657 = vsel %vm1625, %v1619, 0
        %v1660 = vsel %vm1625, %v1620, 0
        %v1663 = vsel %vm1625, %v1621, 0
        %v1666 = vsel %vm1625, %v1622, 0
        %v1669 = vsel %vm1625, %v1623, 0
        %v1672 = vsel %vm1625, %v1624, 0
        %1674 = vmatprep.subr.bf16.mxu0 0
        %1675 = vmatpush1.bf16.msra.mxu0 %v1317
        %1676 = vmatprep.subr.bf16.mxu0 0
        %1677 = vmatpush1.bf16.msra.mxu0 %v1318
        %1678 = vmatprep.subr.bf16.mxu0 0
        %1679 = vmatpush1.bf16.msra.mxu0 %v1319
        %1680 = vmatprep.subr.bf16.mxu0 0
        %1681 = vmatpush1.bf16.msra.mxu0 %v1320
        %1682 = vmatprep.subr.bf16.mxu0 0
        %1683 = vmatpush1.bf16.msra.mxu0 0
        %1684 = vmatprep.subr.bf16.mxu0 0
        %1685 = vmatpush1.bf16.msra.mxu0 0
        %1686 = vmatprep.subr.bf16.mxu0 0
        %1687 = vmatpush1.bf16.msra.mxu0 0
        %1688 = vmatprep.subr.bf16.mxu0 0
        %1689 = vmatpush1.bf16.msra.mxu0 0
        %1690 = vmatprep.subr.bf16.mxu0 0
        %1691 = vmatpush1.bf16.msra.mxu0 0
        %1692 = vmatprep.subr.bf16.mxu0 0
        %1693 = vmatpush1.bf16.msra.mxu0 0
        %1694 = vmatprep.subr.bf16.mxu0 0
        %1695 = vmatpush1.bf16.msra.mxu0 0
        %1696 = vmatprep.subr.bf16.mxu0 0
        %1697 = vmatpush1.bf16.msra.mxu0 0
        %1698 = vmatprep.subr.bf16.mxu0 0
        %1699 = vmatpush1.bf16.msra.mxu0 0
        %1700 = vmatprep.subr.bf16.mxu0 0
        %1701 = vmatpush1.bf16.msra.mxu0 0
        %1702 = vmatprep.subr.bf16.mxu0 0
        %1703 = vmatpush1.bf16.msra.mxu0 0
        %1704 = vmatprep.subr.bf16.mxu0 0
        %1705 = vmatpush1.bf16.msra.mxu0 0
        %1706 = vmatprep.mubr.bf16.mxu0 0
        %1707 = vmatmul.mubr.bf16.gmra.mrb[0].mxu0 %v1627
        %v1708 = vpop.f32.mrb[0].mxu0
        %v1709 = vadd.f32 %v1388, %v1708
        %v1710 = vpop.f32.mrb[0].mxu0
        %v1711 = vpop.f32.mrb[0].mxu0
        %v1712 = vadd.f32 %v1393, %v1711
        %v1713 = vpop.f32.mrb[0].mxu0
        %1714 = vmatprep.mubr.bf16.mxu0 0
        %1715 = vmatmul.mubr.bf16.gmra.mrb[0].mxu0 %v1630
        %v1716 = vpop.f32.mrb[0].mxu0
        %v1717 = vadd.f32 %v1398, %v1716
        %v1718 = vpop.f32.mrb[0].mxu0
        %v1719 = vpop.f32.mrb[0].mxu0
        %v1720 = vadd.f32 %v1403, %v1719
        %v1721 = vpop.f32.mrb[0].mxu0
        %1722 = vmatprep.mubr.bf16.mxu0 0
        %1723 = vmatmul.mubr.bf16.gmra.mrb[0].mxu0 %v1633
        %v1724 = vpop.f32.mrb[0].mxu0
        %v1725 = vadd.f32 %v1408, %v1724
        %v1726 = vpop.f32.mrb[0].mxu0
        %v1727 = vpop.f32.mrb[0].mxu0
        %v1728 = vadd.f32 %v1413, %v1727
        %v1729 = vpop.f32.mrb[0].mxu0
        %1730 = vmatprep.mubr.bf16.mxu0 0
        %1731 = vmatmul.mubr.bf16.gmra.mrb[0].mxu0 %v1636
        %v1732 = vpop.f32.mrb[0].mxu0
        %v1733 = vadd.f32 %v1418, %v1732
        %v1734 = vpop.f32.mrb[0].mxu0
        %v1735 = vpop.f32.mrb[0].mxu0
        %v1736 = vadd.f32 %v1423, %v1735
        %v1737 = vpop.f32.mrb[0].mxu0
        %1738 = vmatprep.mubr.bf16.mxu0 0
        %1739 = vmatmul.mubr.bf16.gmra.mrb[0].mxu0 %v1639
        %v1740 = vpop.f32.mrb[0].mxu0
        %v1741 = vadd.f32 %v1428, %v1740
        %v1742 = vpop.f32.mrb[0].mxu0
        %v1743 = vpop.f32.mrb[0].mxu0
        %v1744 = vadd.f32 %v1433, %v1743
        %v1745 = vpop.f32.mrb[0].mxu0
        %1746 = vmatprep.mubr.bf16.mxu0 0
        %1747 = vmatmul.mubr.bf16.gmra.mrb[0].mxu0 %v1642
        %v1748 = vpop.f32.mrb[0].mxu0
        %v1749 = vadd.f32 %v1438, %v1748
        %v1750 = vpop.f32.mrb[0].mxu0
        %v1751 = vpop.f32.mrb[0].mxu0
        %v1752 = vadd.f32 %v1443, %v1751
        %v1753 = vpop.f32.mrb[0].mxu0
        %1754 = vmatprep.mubr.bf16.mxu0 0
        %1755 = vmatmul.mubr.bf16.gmra.mrb[0].mxu0 %v1645
        %v1756 = vpop.f32.mrb[0].mxu0
        %v1757 = vadd.f32 %v1448, %v1756
        %v1758 = vpop.f32.mrb[0].mxu0
        %v1759 = vpop.f32.mrb[0].mxu0
        %v1760 = vadd.f32 %v1453, %v1759
        %v1761 = vpop.f32.mrb[0].mxu0
        %1762 = vmatprep.mubr.bf16.mxu0 0
        %1763 = vmatmul.mubr.bf16.gmra.mrb[0].mxu0 %v1648
        %v1764 = vpop.f32.mrb[0].mxu0
        %v1765 = vadd.f32 %v1458, %v1764
        %v1766 = vpop.f32.mrb[0].mxu0
        %v1767 = vpop.f32.mrb[0].mxu0
        %v1768 = vadd.f32 %v1463, %v1767
        %v1769 = vpop.f32.mrb[0].mxu0
        %1770 = vmatprep.mubr.bf16.mxu0 0
        %1771 = vmatmul.mubr.bf16.gmra.mrb[0].mxu0 %v1651
        %v1772 = vpop.f32.mrb[0].mxu0
        %v1773 = vadd.f32 %v1468, %v1772
        %v1774 = vpop.f32.mrb[0].mxu0
        %v1775 = vpop.f32.mrb[0].mxu0
        %v1776 = vadd.f32 %v1473, %v1775
        %v1777 = vpop.f32.mrb[0].mxu0
        %1778 = vmatprep.mubr.bf16.mxu0 0
        %1779 = vmatmul.mubr.bf16.gmra.mrb[0].mxu0 %v1654
        %v1780 = vpop.f32.mrb[0].mxu0
        %v1781 = vadd.f32 %v1478, %v1780
        %v1782 = vpop.f32.mrb[0].mxu0
        %v1783 = vpop.f32.mrb[0].mxu0
        %v1784 = vadd.f32 %v1483, %v1783
        %v1785 = vpop.f32.mrb[0].mxu0
        %1786 = vmatprep.mubr.bf16.mxu0 0
        %1787 = vmatmul.mubr.bf16.gmra.mrb[0].mxu0 %v1657
        %v1788 = vpop.f32.mrb[0].mxu0
        %v1789 = vadd.f32 %v1488, %v1788
        %v1790 = vpop.f32.mrb[0].mxu0
        %v1791 = vpop.f32.mrb[0].mxu0
        %v1792 = vadd.f32 %v1493, %v1791
        %v1793 = vpop.f32.mrb[0].mxu0
        %1794 = vmatprep.mubr.bf16.mxu0 0
        %1795 = vmatmul.mubr.bf16.gmra.mrb[0].mxu0 %v1660
        %v1796 = vpop.f32.mrb[0].mxu0
        %v1797 = vadd.f32 %v1498, %v1796
        %v1798 = vpop.f32.mrb[0].mxu0
        %v1799 = vpop.f32.mrb[0].mxu0
        %v1800 = vadd.f32 %v1503, %v1799
        %v1801 = vpop.f32.mrb[0].mxu0
        %1802 = vmatprep.mubr.bf16.mxu0 0
        %1803 = vmatmul.mubr.bf16.gmra.mrb[0].mxu0 %v1663
        %v1804 = vpop.f32.mrb[0].mxu0
        %v1805 = vadd.f32 %v1508, %v1804
        %v1806 = vpop.f32.mrb[0].mxu0
        %v1807 = vpop.f32.mrb[0].mxu0
        %v1808 = vadd.f32 %v1513, %v1807
        %v1809 = vpop.f32.mrb[0].mxu0
        %1810 = vmatprep.mubr.bf16.mxu0 0
        %1811 = vmatmul.mubr.bf16.gmra.mrb[0].mxu0 %v1666
        %v1812 = vpop.f32.mrb[0].mxu0
        %v1813 = vadd.f32 %v1518, %v1812
        %v1814 = vpop.f32.mrb[0].mxu0
        %v1815 = vpop.f32.mrb[0].mxu0
        %v1816 = vadd.f32 %v1523, %v1815
        %v1817 = vpop.f32.mrb[0].mxu0
        %1818 = vmatprep.mubr.bf16.mxu0 0
        %1819 = vmatmul.mubr.bf16.gmra.mrb[0].mxu0 %v1669
        %v1820 = vpop.f32.mrb[0].mxu0
        %v1821 = vadd.f32 %v1528, %v1820
        %v1822 = vpop.f32.mrb[0].mxu0
        %v1823 = vpop.f32.mrb[0].mxu0
        %v1824 = vadd.f32 %v1533, %v1823
        %v1825 = vpop.f32.mrb[0].mxu0
        %1826 = vmatprep.mubr.bf16.mxu0 0
        %1827 = vmatmul.mubr.bf16.gmra.mrb[0].mxu0 %v1672
        %v1828 = vpop.f32.mrb[0].mxu0
        %v1829 = vadd.f32 %v1538, %v1828
        %v1830 = vpop.f32.mrb[0].mxu0
        %v1831 = vpop.f32.mrb[0].mxu0
        %v1832 = vadd.f32 %v1543, %v1831
        %v1833 = vpop.f32.mrb[0].mxu0
        %1834 = vdwg.mxu0
        %v1835 = vmax.f32 %v1709, 0.0
        %v1836 = vmax.f32 %v1712, 0.0
        %v1837 = vmax.f32 %v1717, 0.0
        %v1838 = vmax.f32 %v1720, 0.0
        %v1839 = vmax.f32 %v1725, 0.0
        %v1840 = vmax.f32 %v1728, 0.0
        %v1841 = vmax.f32 %v1733, 0.0
        %v1842 = vmax.f32 %v1736, 0.0
        %v1843 = vmax.f32 %v1741, 0.0
        %v1844 = vmax.f32 %v1744, 0.0
        %v1845 = vmax.f32 %v1749, 0.0
        %v1846 = vmax.f32 %v1752, 0.0
        %v1847 = vmax.f32 %v1757, 0.0
        %v1848 = vmax.f32 %v1760, 0.0
        %v1849 = vmax.f32 %v1765, 0.0
        %v1850 = vmax.f32 %v1768, 0.0
        %v1851 = vmax.f32 %v1773, 0.0
        %v1852 = vmax.f32 %v1776, 0.0
        %v1853 = vmax.f32 %v1781, 0.0
        %v1854 = vmax.f32 %v1784, 0.0
        %v1855 = vmax.f32 %v1789, 0.0
        %v1856 = vmax.f32 %v1792, 0.0
        %v1857 = vmax.f32 %v1797, 0.0
        %v1858 = vmax.f32 %v1800, 0.0
        %v1859 = vmax.f32 %v1805, 0.0
        %v1860 = vmax.f32 %v1808, 0.0
        %v1861 = vmax.f32 %v1813, 0.0
        %v1862 = vmax.f32 %v1816, 0.0
        %v1863 = vmax.f32 %v1821, 0.0
        %v1864 = vmax.f32 %v1824, 0.0
        %v1865 = vmax.f32 %v1829, 0.0
        %v1866 = vmax.f32 %v1832, 0.0
        %v1867 = vpack.c.bf16 %v1836, %v1835
        %v1868 = vpack.c.bf16 %v1838, %v1837
        %v1869 = vpack.c.bf16 %v1840, %v1839
        %v1870 = vpack.c.bf16 %v1842, %v1841
        %v1871 = vpack.c.bf16 %v1844, %v1843
        %v1872 = vpack.c.bf16 %v1846, %v1845
        %v1873 = vpack.c.bf16 %v1848, %v1847
        %v1874 = vpack.c.bf16 %v1850, %v1849
        %v1875 = vpack.c.bf16 %v1852, %v1851
        %v1876 = vpack.c.bf16 %v1854, %v1853
        %v1877 = vpack.c.bf16 %v1856, %v1855
        %v1878 = vpack.c.bf16 %v1858, %v1857
        %v1879 = vpack.c.bf16 %v1860, %v1859
        %v1880 = vpack.c.bf16 %v1862, %v1861
        %v1881 = vpack.c.bf16 %v1864, %v1863
        %v1882 = vpack.c.bf16 %v1866, %v1865
        %v1883 = vld [vmem:[#allocation16] sm:$0xff]
        %v1884 = vld [vmem:[#allocation16 + $0x8] sm:$0xff]
        %v1885 = vld [vmem:[#allocation16 + $0x10] sm:$0xff]
        %v1886 = vld [vmem:[#allocation16 + $0x18] sm:$0xff]
        %v1887 = vld [vmem:[#allocation16 + $0x20] sm:$0xff]
        %v1888 = vld [vmem:[#allocation16 + $0x28] sm:$0xff]
        %v1889 = vld [vmem:[#allocation16 + $0x30] sm:$0xff]
        %v1890 = vld [vmem:[#allocation16 + $0x38] sm:$0xff]
        %v1891 = vld [vmem:[#allocation17] sm:$0xff]
        %v1892 = vld [vmem:[#allocation17 + $0x8] sm:$0xff]
        %v1893 = vld [vmem:[#allocation17 + $0x10] sm:$0xff]
        %v1894 = vld [vmem:[#allocation17 + $0x18] sm:$0xff]
        %v1895 = vld [vmem:[#allocation17 + $0x20] sm:$0xff]
        %v1896 = vld [vmem:[#allocation17 + $0x28] sm:$0xff]
        %v1897 = vld [vmem:[#allocation17 + $0x30] sm:$0xff]
        %v1898 = vld [vmem:[#allocation17 + $0x38] sm:$0xff]
        %1900 = vset.pattern.permute.xlu0 0
        %1901 = vperm.xlu0 %1900, %v1891
        %v1902 = vpop.permute.xlu0 %1901
        %1905 = vset.pattern.permute.xlu0 0
        %1906 = vperm.xlu0 %1905, %v1892
        %v1907 = vpop.permute.xlu0 %1906
        %1910 = vset.pattern.permute.xlu0 0
        %1911 = vperm.xlu0 %1910, %v1893
        %v1912 = vpop.permute.xlu0 %1911
        %1915 = vset.pattern.permute.xlu0 0
        %1916 = vperm.xlu0 %1915, %v1894
        %v1917 = vpop.permute.xlu0 %1916
        %1920 = vset.pattern.permute.xlu0 0
        %1921 = vperm.xlu0 %1920, %v1895
        %v1922 = vpop.permute.xlu0 %1921
        %1925 = vset.pattern.permute.xlu0 0
        %1926 = vperm.xlu0 %1925, %v1896
        %v1927 = vpop.permute.xlu0 %1926
        %1930 = vset.pattern.permute.xlu0 0
        %1931 = vperm.xlu0 %1930, %v1897
        %v1932 = vpop.permute.xlu0 %1931
        %1935 = vset.pattern.permute.xlu0 0
        %1936 = vperm.xlu0 %1935, %v1898
        %v1937 = vpop.permute.xlu0 %1936
        %v1947 = vunpack.c.l.b16 %v1883
        %v1948 = vunpack.c.h.b16 %v1883
        %v1949 = vunpack.c.l.b16 %v1884
        %v1950 = vunpack.c.h.b16 %v1884
        %v1951 = vunpack.c.l.b16 %v1885
        %v1952 = vunpack.c.h.b16 %v1885
        %v1953 = vunpack.c.l.b16 %v1886
        %v1954 = vunpack.c.h.b16 %v1886
        %v1955 = vunpack.c.l.b16 %v1887
        %v1956 = vunpack.c.h.b16 %v1887
        %v1957 = vunpack.c.l.b16 %v1888
        %v1958 = vunpack.c.h.b16 %v1888
        %v1959 = vunpack.c.l.b16 %v1889
        %v1960 = vunpack.c.h.b16 %v1889
        %v1961 = vunpack.c.l.b16 %v1890
        %v1962 = vunpack.c.h.b16 %v1890
        %v1963 = vpack.c.b16 %v1949, %v1947
        %v1964 = vpack.c.b16 %v1950, %v1948
        %v1965 = vpack.c.b16 %v1953, %v1951
        %v1966 = vpack.c.b16 %v1954, %v1952
        %v1967 = vpack.c.b16 %v1957, %v1955
        %v1968 = vpack.c.b16 %v1958, %v1956
        %v1969 = vpack.c.b16 %v1961, %v1959
        %v1970 = vpack.c.b16 %v1962, %v1960
        %1979 = vmatprep.subr.bf16.mxu0 0
        %1980 = vmatpush1.bf16.msra.mxu0 %v1867
        %1981 = vmatprep.subr.bf16.mxu0 0
        %1982 = vmatpush1.bf16.msra.mxu0 %v1868
        %1983 = vmatprep.subr.bf16.mxu0 0
        %1984 = vmatpush1.bf16.msra.mxu0 %v1869
        %1985 = vmatprep.subr.bf16.mxu0 0
        %1986 = vmatpush1.bf16.msra.mxu0 %v1870
        %1987 = vmatprep.subr.bf16.mxu0 0
        %1988 = vmatpush1.bf16.msra.mxu0 %v1871
        %1989 = vmatprep.subr.bf16.mxu0 0
        %1990 = vmatpush1.bf16.msra.mxu0 %v1872
        %1991 = vmatprep.subr.bf16.mxu0 0
        %1992 = vmatpush1.bf16.msra.mxu0 %v1873
        %1993 = vmatprep.subr.bf16.mxu0 0
        %1994 = vmatpush1.bf16.msra.mxu0 %v1874
        %1995 = vmatprep.subr.bf16.mxu0 0
        %1996 = vmatpush1.bf16.msra.mxu0 %v1875
        %1997 = vmatprep.subr.bf16.mxu0 0
        %1998 = vmatpush1.bf16.msra.mxu0 %v1876
        %1999 = vmatprep.subr.bf16.mxu0 0
        %2000 = vmatpush1.bf16.msra.mxu0 %v1877
        %2001 = vmatprep.subr.bf16.mxu0 0
        %2002 = vmatpush1.bf16.msra.mxu0 %v1878
        %2003 = vmatprep.subr.bf16.mxu0 0
        %2004 = vmatpush1.bf16.msra.mxu0 %v1879
        %2005 = vmatprep.subr.bf16.mxu0 0
        %2006 = vmatpush1.bf16.msra.mxu0 %v1880
        %2007 = vmatprep.subr.bf16.mxu0 0
        %2008 = vmatpush1.bf16.msra.mxu0 %v1881
        %2009 = vmatprep.subr.bf16.mxu0 0
        %2010 = vmatpush1.bf16.msra.mxu0 %v1882
        %2011 = vmatprep.mubr.bf16.mxu0 %v1964
        %2012 = vmatmul.mubr.bf16.gmra.mrb[0].mxu0 %v1963
        %v2013 = vpop.f32.mrb[0].mxu0
        %v2014 = vadd.f32 %v1902, %v2013
        %v2015 = vpop.f32.mrb[0].mxu0
        %v2016 = vpop.f32.mrb[0].mxu0
        %v2017 = vadd.f32 %v1907, %v2016
        %v2018 = vpop.f32.mrb[0].mxu0
        %2019 = vmatprep.mubr.bf16.mxu0 %v1966
        %2020 = vmatmul.mubr.bf16.gmra.mrb[0].mxu0 %v1965
        %v2021 = vpop.f32.mrb[0].mxu0
        %v2022 = vadd.f32 %v1912, %v2021
        %v2023 = vpop.f32.mrb[0].mxu0
        %v2024 = vpop.f32.mrb[0].mxu0
        %v2025 = vadd.f32 %v1917, %v2024
        %v2026 = vpop.f32.mrb[0].mxu0
        %2027 = vmatprep.mubr.bf16.mxu0 %v1968
        %2028 = vmatmul.mubr.bf16.gmra.mrb[0].mxu0 %v1967
        %v2029 = vpop.f32.mrb[0].mxu0
        %v2030 = vadd.f32 %v1922, %v2029
        %v2031 = vpop.f32.mrb[0].mxu0
        %v2032 = vpop.f32.mrb[0].mxu0
        %v2033 = vadd.f32 %v1927, %v2032
        %v2034 = vpop.f32.mrb[0].mxu0
        %2035 = vmatprep.mubr.bf16.mxu0 %v1970
        %2036 = vmatmul.mubr.bf16.gmra.mrb[0].mxu0 %v1969
        %v2037 = vpop.f32.mrb[0].mxu0
        %v2038 = vadd.f32 %v1932, %v2037
        %v2039 = vpop.f32.mrb[0].mxu0
        %v2040 = vpop.f32.mrb[0].mxu0
        %v2041 = vadd.f32 %v1937, %v2040
        %v2042 = vpop.f32.mrb[0].mxu0
        %2043 = vdwg.mxu0
        %2044 = vst [vmem:[%s578] sm:$0xff] %v2014
        %2045 = vst [vmem:[%s578 + $0x8] sm:$0xff] %v2017
        %2046 = vst [vmem:[%s578 + $0x10] sm:$0xff] %v2022
        %2047 = vst [vmem:[%s578 + $0x18] sm:$0xff] %v2025
        %2048 = vst [vmem:[%s578 + $0x20] sm:$0xff] %v2030
        %2049 = vst [vmem:[%s578 + $0x28] sm:$0xff] %v2033
        %2050 = vst [vmem:[%s578 + $0x30] sm:$0xff] %v2038
        %2051 = vst [vmem:[%s578 + $0x38] sm:$0xff] %v2041
        %s2052 = sand.u32 %s287, 1
        %s2053 = scalar_lea.sflag [#allocation4], %s2052
        %s2054 = sand.u32 %s287, 1
        %s2055 = smul.addr %s2054, 64
        %s2056 = scalar_lea.vmem [#allocation19], %s2055
        // Predicated region
        $region101: #{tpu_custom_call.1} parent=59 // pred_check
          %p2057 = pneg %p297
        $region102: #{tpu_custom_call.1} parent=59 // pred_check_branch
          %2059 = sbr.rel (%p2057) target = $region104
        $region103: #{tpu_custom_call.1} parent=59 // pred_region
          %s2061 = ssub.s32 1024, 1024
          %2062 = vsyncadd %s2053, %s2061
          %s2063 = smul.addr %s40, 16
          %s2064 = sadd.s32 %s41, %s2063
          %s2065 = smul.addr %s2064, 128
          %s2066 = scalar_lea.hbm %s10, %s2065
          %s2067 = sshll.u32 %s2056, 4
          %s2068 = int_to_ptr.vmem [resolvable:$true] %s2067
          %2073 = dma.vmem_to_hbm [thread:$0]  %s2068, 1024, %s2066, %s2053, 128, 256, 8
        $region104: #{tpu_custom_call.1} parent=59 // pred_fallthru
          _
      $region60: #{tpu_custom_call.1} parent=5 // pred_fallthru
        _
      %p2074 = scmp.le.s32.totalorder 2, %s31
      // Predicated region
      $region105: #{tpu_custom_call.1} parent=5 // pred_check
        %p2075 = pneg %p2074
      $region106: #{tpu_custom_call.1} parent=5 // pred_check_branch
        %2077 = sbr.rel (%p2075) target = $region108
      $region107: #{tpu_custom_call.1} parent=5 // pred_region
        %s2078 = ssub.s32 %s31, 2
        // Predicated region
        $region109: #{tpu_custom_call.1} parent=107 // pred_check
          %p2079 = pneg %p303
        $region110: #{tpu_custom_call.1} parent=107 // pred_check_branch
          %2081 = sbr.rel (%p2079) target = $region112
        $region111: #{tpu_custom_call.1} parent=107 // pred_region
          %s2082 = sand.u32 %s288, 1
          %s2083 = scalar_lea.sflag [#allocation4], %s2082
          %s2084 = sand.u32 %s288, 1
          %s2085 = smul.addr %s2084, 64
          %s2086 = scalar_lea.vmem [#allocation19], %s2085
          %2087 = dma.done %s2083, 1024
        $region112: #{tpu_custom_call.1} parent=107 // pred_fallthru
          _
      $region108: #{tpu_custom_call.1} parent=5 // pred_fallthru
        _
    $region6: #{tpu_custom_call.1} parent=1 // loop_footer
      %s35 = sadd.s32 1, %s31
    $region7: #{tpu_custom_call.1} parent=1 // loop_footer_branch
      %30 = sbr.rel target = $region3
    $region8: #{tpu_custom_call.1} parent=1 // loop_exit
      _
    %2088 = vsyncpa [#allocation3], 1
    %s2089 = scalar_lea.sflag [#allocation3], 1
    %2090 = vsyncpa %s2089, 1
    %2091 = vsyncpa [#allocation6], 1
    %s2092 = scalar_lea.sflag [#allocation6], 1
    %2093 = vsyncpa %s2092, 1
    %2094 = vsyncpa [#allocation9], 1
    %2095 = vsyncpa [#allocation12], 1
    %2096 = vsyncpa [#allocation15], 1
    %s2097 = scalar_lea.sflag [#allocation15], 1
    %2098 = vsyncpa %s2097, 1
    %2099 = vsyncpa [#allocation18], 1
    %2100 = vsyncpa [#allocation4], 1
    %s2101 = scalar_lea.sflag [#allocation4], 1
    %2102 = vsyncpa %s2101, 1

</llo_original>
